<compile_context>
chip_gen: v5e
topology: v5e:2x2
jax: 0.10.0
libtpu: 0.0.40
codegen_flags: <defaults>
</compile_context>

<pallas_src>
import functools

import jax
import jax.numpy as jnp
from jax.experimental import pallas as pl
from jax.experimental.pallas import tpu as pltpu

_LANE = 128


def _round_up(v, m):
    return ((v + m - 1) // m) * m


# ---------------------------------------------------------------------------
# Prologue kernel (grid = row tiles): h = x @ W + b, h[global row 0] = 0,
# emitted in f32 (self term) and agg_dtype (aggregation MXU feed).
# ---------------------------------------------------------------------------
def _linear_kernel(x_ref, w_ref, b_ref, hf_ref, ha_ref, *, tile):
    h = jnp.dot(x_ref[...], w_ref[...], preferred_element_type=jnp.float32)
    h = h + b_ref[...]
    # x[0].fill_(0): one (tile,1) select per row tile (runs num_tiles times,
    # not num_tiles^2 times, so it is cheap here).
    row = jax.lax.broadcasted_iota(jnp.int32, (tile, 1), 0) + pl.program_id(0) * tile
    h = jnp.where(row == 0, 0.0, h)
    hf_ref[...] = h
    ha_ref[...] = h.astype(ha_ref.dtype)


# ---------------------------------------------------------------------------
# Aggregation kernel. Grid = (row tile i [parallel], neighbor col tile j
# [arbitrary]):
#   j == 0      : acc_i  = (1 + eps) * h_i           (exact f32)
#   non-empty j : acc_i += C_ij @ h_j                 (MXU, f32 accumulate)
#   j == last   : out_i  = relu(acc_i)
# with C_ij[r, c] = #{k : a2a[row r of tile i, k] == j*tile + c}.
# ---------------------------------------------------------------------------
def _gin_agg_kernel(nb_min_ref, nb_max_ref, a2a_ref, h_nb_ref, h_self_ref,
                    o_ref, acc_ref, *, epsilon, max_nb, tile, agg_dtype):
    i = pl.program_id(0)
    j = pl.program_id(1)

    @pl.when(j == 0)
    def _init():
        if epsilon == 0.0:                       # static Python branch
            acc_ref[...] = h_self_ref[...]
        else:
            acc_ref[...] = (1.0 + epsilon) * h_self_ref[...]

    # Skip neighbor-column blocks containing no neighbor id of this row tile
    # (per-row-tile min/max neighbor ids are scalar-prefetched into SMEM).
    blk_lo = j * tile
    nonempty = jnp.logical_and(nb_min_ref[i] < blk_lo + tile,
                               nb_max_ref[i] >= blk_lo)

    @pl.when(nonempty)
    def _aggregate():
        idx = a2a_ref[...]                                     # [tile, K] i32
        # Build counts in 128-lane column chunks (bounds vreg pressure),
        # accumulate compares in int32 (native on v5e/v6e/v7x), cast to
        # agg_dtype once right before the MXU matmul.
        for c in range(tile // _LANE):                         # static
            col = (jax.lax.broadcasted_iota(jnp.int32, (tile, _LANE), 1)
                   + (blk_lo + c * _LANE))
            counts = jnp.zeros((tile, _LANE), jnp.int32)
            for k in range(max_nb):                            # static, small
                counts = counts + (idx[:, k:k + 1] == col).astype(jnp.int32)
            acc_ref[...] += jnp.dot(
                counts.astype(agg_dtype),
                h_nb_ref[pl.ds(c * _LANE, _LANE), :],
                preferred_element_type=jnp.float32)

    @pl.when(j == pl.num_programs(1) - 1)
    def _store():
        o_ref[...] = jnp.maximum(acc_ref[...], 0.0).astype(o_ref.dtype)


def prepare_gin_params(weight, bias, lane=_LANE):
    """Hoisted per-layer prep (call once, reuse every forward):
    torch-layout weight [Dout, Din] -> [Din, Dp], Dp = round_up(Dout, 128);
    bias [Dout] -> [1, Dp]; padded columns are zero so padded outputs relu to 0."""
    d_out, d_in = weight.shape
    d_pad = _round_up(d_out, lane)
    w_pad = jnp.zeros((d_in, d_pad), jnp.float32).at[:, :d_out].set(
        weight.T.astype(jnp.float32))
    b_pad = jnp.zeros((1, d_pad), jnp.float32).at[:, :d_out].set(
        bias.astype(jnp.float32))
    return w_pad, b_pad


@functools.partial(jax.jit,
                   static_argnames=("d_out", "epsilon", "tile", "agg_dtype"))
def gin_layer_forward(x, w_pad, b_pad, a2a, *, d_out, epsilon=0.0, tile=256,
                      agg_dtype=jnp.bfloat16):
    """x: [N, Din] f32; w_pad/b_pad from prepare_gin_params; a2a: [N, K] int.
    Returns [N, d_out] f32 = relu((1+eps)*h + sum_k h[a2a[:,k]]), h=Linear(x), h[0]=0."""
    n, d_in = x.shape
    d_pad = w_pad.shape[1]
    k_nb = a2a.shape[1]

    assert tile % _LANE == 0
    # Shrink tile for tiny graphs (less padded work).  tile=256 fills the
    # 256x256 MXU on v6e/v7x; prefer tile=128 on v5e (4x128x128 MXU).
    tile = min(tile, max(_LANE, _round_up(n, _LANE)))
    n_pad = _round_up(n, tile)
    num_tiles = n_pad // tile

    if n_pad != n:
        x = jnp.pad(x, ((0, n_pad - n), (0, 0)))
        # Padded a2a rows point at atom 0 (whose h is zeroed) -> inert; the
        # corresponding output rows are sliced off below anyway.
        a2a = jnp.pad(a2a, ((0, n_pad - n), (0, 0)))
    a2a = a2a.astype(jnp.int32)

    # Per-row-tile neighbor id range for empty-block skipping (scalar prefetch).
    a2a_t = a2a.reshape(num_tiles, tile * k_nb)
    nb_min = jnp.min(a2a_t, axis=1).astype(jnp.int32)
    nb_max = jnp.max(a2a_t, axis=1).astype(jnp.int32)

    agg_bytes = jnp.dtype(agg_dtype).itemsize

    # ---- prologue: h (f32 + agg_dtype), computed once per row tile ----------
    h_f32, h_agg = pl.pallas_call(
        functools.partial(_linear_kernel, tile=tile),
        out_shape=(jax.ShapeDtypeStruct((n_pad, d_pad), jnp.float32),
                   jax.ShapeDtypeStruct((n_pad, d_pad), agg_dtype)),
        grid_spec=pltpu.PrefetchScalarGridSpec(
            num_scalar_prefetch=0,
            grid=(num_tiles,),
            in_specs=[pl.BlockSpec((tile, d_in), lambda i: (i, 0)),
                      pl.BlockSpec((d_in, d_pad), lambda i: (0, 0)),
                      pl.BlockSpec((1, d_pad), lambda i: (0, 0))],
            out_specs=(pl.BlockSpec((tile, d_pad), lambda i: (i, 0)),
                       pl.BlockSpec((tile, d_pad), lambda i: (i, 0))),
        ),
        compiler_params=pltpu.CompilerParams(dimension_semantics=("parallel",)),
        cost_estimate=pl.CostEstimate(
            flops=int(2 * n_pad * d_in * d_pad),
            transcendentals=0,
            bytes_accessed=int(n_pad * d_in * 4 + d_in * d_pad * 4 + d_pad * 4
                               + n_pad * d_pad * (4 + agg_bytes))),
    )(x, w_pad, b_pad)

    # ---- aggregation: acc_i = (1+eps)*h_i + sum_j C_ij @ h_j, then relu -----
    kernel = functools.partial(_gin_agg_kernel, epsilon=float(epsilon),
                               max_nb=k_nb, tile=tile, agg_dtype=agg_dtype)
    cost = pl.CostEstimate(
        flops=int(2 * n_pad * n_pad * d_pad),
        transcendentals=0,
        bytes_accessed=int(n_pad * k_nb * 4
                           + num_tiles * n_pad * d_pad * agg_bytes
                           + 2 * n_pad * d_pad * 4),
    )
    out = pl.pallas_call(
        kernel,
        out_shape=jax.ShapeDtypeStruct((n_pad, d_pad), jnp.float32),
        grid_spec=pltpu.PrefetchScalarGridSpec(
            num_scalar_prefetch=2,
            grid=(num_tiles, num_tiles),
            in_specs=[
                pl.BlockSpec((tile, k_nb), lambda i, j, mn, mx: (i, 0)),   # a2a rows
                pl.BlockSpec((tile, d_pad), lambda i, j, mn, mx: (j, 0)),  # h (agg) col tile
                pl.BlockSpec((tile, d_pad), lambda i, j, mn, mx: (i, 0)),  # h (f32) self tile
            ],
            out_specs=pl.BlockSpec((tile, d_pad), lambda i, j, mn, mx: (i, 0)),
            scratch_shapes=[pltpu.VMEM((tile, d_pad), jnp.float32)],
        ),
        compiler_params=pltpu.CompilerParams(
            dimension_semantics=("parallel", "arbitrary")),
        cost_estimate=cost,
    )(nb_min, nb_max, a2a, h_agg, h_f32)

    return out[:n, :d_out]


def _reference(x, weight, bias, a2a, epsilon=0.0):
    h = x @ weight.T + bias
    h = h.at[0].set(0.0)
    msg = jnp.sum(h[a2a], axis=1)
    return jnp.maximum((1.0 + epsilon) * h + msg, 0.0)


def _make_case(key, num_atoms, num_bonds, input_dim, output_dim, max_nb):
    k_x, k_w, k_b, k_bfa, k_afb = jax.random.split(key, 5)
    x = jax.random.normal(k_x, (num_atoms, input_dim), dtype=jnp.float32)
    bound = 1.0 / (input_dim ** 0.5)
    weight = jax.random.uniform(k_w, (output_dim, input_dim),
                                minval=-bound, maxval=bound, dtype=jnp.float32)
    bias = jax.random.uniform(k_b, (output_dim,),
                              minval=-bound, maxval=bound, dtype=jnp.float32)
    # Graph index tables (glue / setup in plain JAX):
    b_from_a = jax.random.randint(k_bfa, (num_bonds,), 0, num_atoms,
                                  dtype=jnp.int32).at[0].set(0)
    a_from_b = jax.random.randint(k_afb, (num_atoms, max_nb), 0, num_bonds,
                                  dtype=jnp.int32)
    a2a = b_from_a[a_from_b]      # [num_atoms, max_nb] neighbor atom ids
    return x, weight, bias, a2a


if __name__ == "__main__":
    key = jax.random.PRNGKey(0)
    k1, k2 = jax.random.split(key)

    # Case 1: small graph (single grid tile), eps=0, bf16 aggregation (default).
    x, w, b, a2a = _make_case(k1, num_atoms=32, num_bonds=64,
                              input_dim=16, output_dim=32, max_nb=6)
    w_pad, b_pad = prepare_gin_params(w, b)          # hoisted, done once per layer
    out = gin_layer_forward(x, w_pad, b_pad, a2a, d_out=32, epsilon=0.0)
    out = jax.block_until_ready(out)
    ref = _reference(x, w, b, a2a, 0.0)
    assert out.shape == ref.shape
    assert jnp.allclose(out, ref, atol=3e-2, rtol=3e-2)   # bf16 h-rounding tolerance

    # Case 1b: same inputs, f32 aggregation (verification mode) -> tight match.
    out32 = gin_layer_forward(x, w_pad, b_pad, a2a, d_out=32, epsilon=0.0,
                              agg_dtype=jnp.float32)
    out32 = jax.block_until_ready(out32)
    assert jnp.allclose(out32, ref, atol=2e-3, rtol=2e-3)

    # Case 2: multiple row/column tiles (2x2 grid with tile=256), nonzero eps.
    x2, w2, b2, a2a2 = _make_case(k2, num_atoms=300, num_bonds=600,
                                  input_dim=16, output_dim=32, max_nb=6)
    w2_pad, b2_pad = prepare_gin_params(w2, b2)
    ref2 = _reference(x2, w2, b2, a2a2, 0.1)
    out2 = gin_layer_forward(x2, w2_pad, b2_pad, a2a2, d_out=32, epsilon=0.1,
                             agg_dtype=jnp.float32)
    out2 = jax.block_until_ready(out2)
    assert out2.shape == ref2.shape
    assert jnp.allclose(out2, ref2, atol=2e-3, rtol=2e-3)

    # Case 2b: same multi-tile graph on the bf16 performance path.
    out2b = gin_layer_forward(x2, w2_pad, b2_pad, a2a2, d_out=32, epsilon=0.1)
    out2b = jax.block_until_ready(out2b)
    assert jnp.allclose(out2b, ref2, atol=3e-2, rtol=3e-2)

    print("KERNEL_OK")
</pallas_src>

<mosaic_0001>
module attributes {stable_mosaic.version = 11 : i64} {
  func.func @_linear_kernel(%arg0: i32, %arg1: memref<128x16xf32, #tpu.memory_space<vmem>>, %arg2: memref<16x128xf32, #tpu.memory_space<vmem>>, %arg3: memref<1x128xf32, #tpu.memory_space<vmem>>, %arg4: memref<128x128xf32, #tpu.memory_space<vmem>>, %arg5: memref<128x128xbf16, #tpu.memory_space<vmem>>) attributes {dimension_semantics = [#tpu.dimension_semantics<parallel>], iteration_bounds = array<i64: 1>, scalar_prefetch = 0 : i64, scratch_operands = 0 : i64, tpu.core_type = #tpu.core_type<tc>, window_params = [{transform_indices = @transform_0, window_bounds = array<i64: 128, 16>}, {pipeline_mode = #tpu.pipeline_mode<synchronous>, transform_indices = @transform_1, window_bounds = array<i64: 16, 128>}, {pipeline_mode = #tpu.pipeline_mode<synchronous>, transform_indices = @transform_2, window_bounds = array<i64: 1, 128>}, {transform_indices = @transform_3, window_bounds = array<i64: 128, 128>}, {transform_indices = @transform_4, window_bounds = array<i64: 128, 128>}]} {
    %c0 = arith.constant 0 : index
    %c0_0 = arith.constant 0 : index
    %0 = vector.load %arg1[%c0, %c0_0] : memref<128x16xf32, #tpu.memory_space<vmem>>, vector<128x16xf32>
    %c0_1 = arith.constant 0 : index
    %c0_2 = arith.constant 0 : index
    %1 = vector.load %arg2[%c0_1, %c0_2] : memref<16x128xf32, #tpu.memory_space<vmem>>, vector<16x128xf32>
    %cst = arith.constant dense<0.000000e+00> : vector<128x128xf32>
    %2 = tpu.matmul %0, %1, %cst {dimension_numbers = #tpu.dot_dimension_numbers<[1], [0], [0], [1], [0, 0, 1, 1], [], []>} : vector<128x16xf32>, vector<16x128xf32>, vector<128x128xf32> -> vector<128x128xf32>
    %c0_3 = arith.constant 0 : index
    %c0_4 = arith.constant 0 : index
    %3 = vector.load %arg3[%c0_3, %c0_4] : memref<1x128xf32, #tpu.memory_space<vmem>>, vector<1x128xf32>
    %4 = vector.broadcast %3 : vector<1x128xf32> to vector<128x128xf32>
    %5 = arith.addf %2, %4 : vector<128x128xf32>
    %6 = tpu.iota {dimensions = array<i32: 0>} : vector<128x1xi32>
    %c128_i32 = arith.constant 128 : i32
    %7 = arith.muli %arg0, %c128_i32 : i32
    %8 = vector.broadcast %7 : i32 to vector<128x1xi32>
    %9 = arith.addi %6, %8 : vector<128x1xi32>
    %c0_i32 = arith.constant 0 : i32
    %10 = vector.broadcast %c0_i32 : i32 to vector<128x1xi32>
    %11 = arith.cmpi eq, %9, %10 : vector<128x1xi32>
    %cst_5 = arith.constant 0.000000e+00 : f32
    %12 = vector.shape_cast %11 : vector<128x1xi1> to vector<128x1xi1>
    %13 = vector.broadcast %12 : vector<128x1xi1> to vector<128x128xi1>
    %14 = vector.broadcast %cst_5 : f32 to vector<128x128xf32>
    %15 = arith.select %13, %14, %5 : vector<128x128xi1>, vector<128x128xf32>
    %c0_6 = arith.constant 0 : index
    %c0_7 = arith.constant 0 : index
    %16 = vector.load %arg4[%c0_6, %c0_7] : memref<128x128xf32, #tpu.memory_space<vmem>>, vector<128x128xf32>
    tpu.vector_store %arg4[%c0_6, %c0_7], %15 {strides = array<i32>} : memref<128x128xf32, #tpu.memory_space<vmem>>, vector<128x128xf32>,
    %17 = arith.truncf %15 : vector<128x128xf32> to vector<128x128xbf16>
    %c0_8 = arith.constant 0 : index
    %c0_9 = arith.constant 0 : index
    %18 = vector.load %arg5[%c0_8, %c0_9] : memref<128x128xbf16, #tpu.memory_space<vmem>>, vector<128x128xbf16>
    tpu.vector_store %arg5[%c0_8, %c0_9], %17 {strides = array<i32>} : memref<128x128xbf16, #tpu.memory_space<vmem>>, vector<128x128xbf16>,
    return
  }
  func.func @transform_0(%arg0: i32) -> (i32, i32) {
    %c0_i32 = arith.constant 0 : i32
    %c0_i32_0 = arith.constant 0 : i32
    return %arg0, %c0_i32 : i32, i32
  }
  func.func @transform_1(%arg0: i32) -> (i32, i32) {
    %c0_i32 = arith.constant 0 : i32
    %c0_i32_0 = arith.constant 0 : i32
    %c0_i32_1 = arith.constant 0 : i32
    return %c0_i32, %c0_i32_0 : i32, i32
  }
  func.func @transform_2(%arg0: i32) -> (i32, i32) {
    %c0_i32 = arith.constant 0 : i32
    %c0_i32_0 = arith.constant 0 : i32
    %c0_i32_1 = arith.constant 0 : i32
    return %c0_i32, %c0_i32_0 : i32, i32
  }
  func.func @transform_3(%arg0: i32) -> (i32, i32) {
    %c0_i32 = arith.constant 0 : i32
    %c0_i32_0 = arith.constant 0 : i32
    return %arg0, %c0_i32 : i32, i32
  }
  func.func @transform_4(%arg0: i32) -> (i32, i32) {
    %c0_i32 = arith.constant 0 : i32
    %c0_i32_0 = arith.constant 0 : i32
    return %arg0, %c0_i32 : i32, i32
  }
}

module attributes {stable_mosaic.version = 11 : i64} {
  func.func @_gin_agg_kernel(%arg0: i32, %arg1: i32, %arg2: memref<1xi32, #tpu.memory_space<smem>>, %arg3: memref<1xi32, #tpu.memory_space<smem>>, %arg4: memref<128x6xi32, #tpu.memory_space<vmem>>, %arg5: memref<128x128xbf16, #tpu.memory_space<vmem>>, %arg6: memref<128x128xf32, #tpu.memory_space<vmem>>, %arg7: memref<128x128xf32, #tpu.memory_space<vmem>>, %arg8: memref<128x128xf32, #tpu.memory_space<vmem>>) attributes {dimension_semantics = [#tpu.dimension_semantics<parallel>, #tpu.dimension_semantics<arbitrary>], iteration_bounds = array<i64: 1, 1>, scalar_prefetch = 2 : i64, scratch_operands = 1 : i64, tpu.core_type = #tpu.core_type<tc>, window_params = [{transform_indices = @transform_0, window_bounds = array<i64: 128, 6>}, {transform_indices = @transform_1, window_bounds = array<i64: 128, 128>}, {transform_indices = @transform_2, window_bounds = array<i64: 128, 128>}, {transform_indices = @transform_3, window_bounds = array<i64: 128, 128>}]} {
    %c0_i32 = arith.constant 0 : i32
    %0 = arith.cmpi eq, %arg1, %c0_i32 : i32
    %1 = arith.extui %0 : i1 to i32
    %c0_i32_0 = arith.constant 0 : i32
    %2 = arith.cmpi ne, %1, %c0_i32_0 : i32
    scf.if %2 {
      %c0 = arith.constant 0 : index
      %c0_5 = arith.constant 0 : index
      %17 = vector.load %arg6[%c0, %c0_5] : memref<128x128xf32, #tpu.memory_space<vmem>>, vector<128x128xf32>
      %c0_6 = arith.constant 0 : index
      %c0_7 = arith.constant 0 : index
      %18 = vector.load %arg8[%c0_6, %c0_7] : memref<128x128xf32, #tpu.memory_space<vmem>>, vector<128x128xf32>
      tpu.vector_store %arg8[%c0_6, %c0_7], %17 {strides = array<i32>} : memref<128x128xf32, #tpu.memory_space<vmem>>, vector<128x128xf32>,
    } else {
    }
    %c128_i32 = arith.constant 128 : i32
    %3 = arith.muli %arg1, %c128_i32 : i32
    %4 = arith.index_cast %arg0 : i32 to index
    %5 = memref.load %arg2[%4] : memref<1xi32, #tpu.memory_space<smem>>
    %c128_i32_1 = arith.constant 128 : i32
    %6 = arith.addi %3, %c128_i32_1 : i32
    %7 = arith.cmpi slt, %5, %6 : i32
    %8 = arith.index_cast %arg0 : i32 to index
    %9 = memref.load %arg3[%8] : memref<1xi32, #tpu.memory_space<smem>>
    %10 = arith.cmpi sge, %9, %3 : i32
    %11 = arith.andi %7, %10 : i1
    %12 = arith.extui %11 : i1 to i32
    %c0_i32_2 = arith.constant 0 : i32
    %13 = arith.cmpi ne, %12, %c0_i32_2 : i32
    scf.if %13 {
      %c0 = arith.constant 0 : index
      %c0_5 = arith.constant 0 : index
      %17 = vector.load %arg4[%c0, %c0_5] : memref<128x6xi32, #tpu.memory_space<vmem>>, vector<128x6xi32>
      %18 = tpu.iota {dimensions = array<i32: 1>} : vector<128x128xi32>
      %c0_i32_6 = arith.constant 0 : i32
      %19 = arith.addi %3, %c0_i32_6 : i32
      %20 = vector.broadcast %19 : i32 to vector<128x128xi32>
      %21 = arith.addi %18, %20 : vector<128x128xi32>
      %c0_i32_7 = arith.constant 0 : i32
      %22 = vector.broadcast %c0_i32_7 : i32 to vector<128x128xi32>
      %23 = vector.extract_strided_slice %17 {offsets = [0, 0], sizes = [128, 1], strides = [1, 1]} : vector<128x6xi32> to vector<128x1xi32>
      %24 = vector.broadcast %23 : vector<128x1xi32> to vector<128x128xi32>
      %25 = arith.cmpi eq, %24, %21 : vector<128x128xi32>
      %26 = arith.extui %25 : vector<128x128xi1> to vector<128x128xi32>
      %27 = arith.addi %22, %26 : vector<128x128xi32>
      %28 = vector.extract_strided_slice %17 {offsets = [0, 1], sizes = [128, 1], strides = [1, 1]} : vector<128x6xi32> to vector<128x1xi32>
      %29 = vector.broadcast %28 : vector<128x1xi32> to vector<128x128xi32>
      %30 = arith.cmpi eq, %29, %21 : vector<128x128xi32>
      %31 = arith.extui %30 : vector<128x128xi1> to vector<128x128xi32>
      %32 = arith.addi %27, %31 : vector<128x128xi32>
      %33 = vector.extract_strided_slice %17 {offsets = [0, 2], sizes = [128, 1], strides = [1, 1]} : vector<128x6xi32> to vector<128x1xi32>
      %34 = vector.broadcast %33 : vector<128x1xi32> to vector<128x128xi32>
      %35 = arith.cmpi eq, %34, %21 : vector<128x128xi32>
      %36 = arith.extui %35 : vector<128x128xi1> to vector<128x128xi32>
      %37 = arith.addi %32, %36 : vector<128x128xi32>
      %38 = vector.extract_strided_slice %17 {offsets = [0, 3], sizes = [128, 1], strides = [1, 1]} : vector<128x6xi32> to vector<128x1xi32>
      %39 = vector.broadcast %38 : vector<128x1xi32> to vector<128x128xi32>
      %40 = arith.cmpi eq, %39, %21 : vector<128x128xi32>
      %41 = arith.extui %40 : vector<128x128xi1> to vector<128x128xi32>
      %42 = arith.addi %37, %41 : vector<128x128xi32>
      %43 = vector.extract_strided_slice %17 {offsets = [0, 4], sizes = [128, 1], strides = [1, 1]} : vector<128x6xi32> to vector<128x1xi32>
      %44 = vector.broadcast %43 : vector<128x1xi32> to vector<128x128xi32>
      %45 = arith.cmpi eq, %44, %21 : vector<128x128xi32>
      %46 = arith.extui %45 : vector<128x128xi1> to vector<128x128xi32>
      %47 = arith.addi %42, %46 : vector<128x128xi32>
      %48 = vector.extract_strided_slice %17 {offsets = [0, 5], sizes = [128, 1], strides = [1, 1]} : vector<128x6xi32> to vector<128x1xi32>
      %49 = vector.broadcast %48 : vector<128x1xi32> to vector<128x128xi32>
      %50 = arith.cmpi eq, %49, %21 : vector<128x128xi32>
      %51 = arith.extui %50 : vector<128x128xi1> to vector<128x128xi32>
      %52 = arith.addi %47, %51 : vector<128x128xi32>
      %c0_8 = arith.constant 0 : index
      %c0_9 = arith.constant 0 : index
      %53 = vector.load %arg8[%c0_8, %c0_9] : memref<128x128xf32, #tpu.memory_space<vmem>>, vector<128x128xf32>
      %54 = arith.sitofp %52 : vector<128x128xi32> to vector<128x128xbf16>
      %c0_10 = arith.constant 0 : index
      %c0_11 = arith.constant 0 : index
      %55 = vector.load %arg5[%c0_10, %c0_11] : memref<128x128xbf16, #tpu.memory_space<vmem>>, vector<128x128xbf16>
      %cst = arith.constant dense<0.000000e+00> : vector<128x128xf32>
      %56 = tpu.matmul %54, %55, %cst {dimension_numbers = #tpu.dot_dimension_numbers<[1], [0], [0], [1], [0, 0, 1, 1], [], []>} : vector<128x128xbf16>, vector<128x128xbf16>, vector<128x128xf32> -> vector<128x128xf32>
      %57 = arith.addf %53, %56 : vector<128x128xf32>
      %c0_12 = arith.constant 0 : index
      %c0_13 = arith.constant 0 : index
      %58 = vector.load %arg8[%c0_12, %c0_13] : memref<128x128xf32, #tpu.memory_space<vmem>>, vector<128x128xf32>
      tpu.vector_store %arg8[%c0_12, %c0_13], %57 {strides = array<i32>} : memref<128x128xf32, #tpu.memory_space<vmem>>, vector<128x128xf32>,
    } else {
    }
    %c0_i32_3 = arith.constant 0 : i32
    %14 = arith.cmpi eq, %arg1, %c0_i32_3 : i32
    %15 = arith.extui %14 : i1 to i32
    %c0_i32_4 = arith.constant 0 : i32
    %16 = arith.cmpi ne, %15, %c0_i32_4 : i32
    scf.if %16 {
      %c0 = arith.constant 0 : index
      %c0_5 = arith.constant 0 : index
      %17 = vector.load %arg8[%c0, %c0_5] : memref<128x128xf32, #tpu.memory_space<vmem>>, vector<128x128xf32>
      %cst = arith.constant 0.000000e+00 : f32
      %18 = vector.broadcast %cst : f32 to vector<128x128xf32>
      %19 = arith.maximumf %17, %18 : vector<128x128xf32>
      %c0_6 = arith.constant 0 : index
      %c0_7 = arith.constant 0 : index
      %20 = vector.load %arg7[%c0_6, %c0_7] : memref<128x128xf32, #tpu.memory_space<vmem>>, vector<128x128xf32>
      tpu.vector_store %arg7[%c0_6, %c0_7], %19 {strides = array<i32>} : memref<128x128xf32, #tpu.memory_space<vmem>>, vector<128x128xf32>,
    } else {
    }
    return
  }
  func.func @transform_0(%arg0: i32, %arg1: i32, %arg2: memref<1xi32, #tpu.memory_space<smem>>, %arg3: memref<1xi32, #tpu.memory_space<smem>>) -> (i32, i32) {
    %c0_i32 = arith.constant 0 : i32
    %c0_i32_0 = arith.constant 0 : i32
    return %arg0, %c0_i32 : i32, i32
  }
  func.func @transform_1(%arg0: i32, %arg1: i32, %arg2: memref<1xi32, #tpu.memory_space<smem>>, %arg3: memref<1xi32, #tpu.memory_space<smem>>) -> (i32, i32) {
    %c0_i32 = arith.constant 0 : i32
    %c0_i32_0 = arith.constant 0 : i32
    return %arg1, %c0_i32 : i32, i32
  }
  func.func @transform_2(%arg0: i32, %arg1: i32, %arg2: memref<1xi32, #tpu.memory_space<smem>>, %arg3: memref<1xi32, #tpu.memory_space<smem>>) -> (i32, i32) {
    %c0_i32 = arith.constant 0 : i32
    %c0_i32_0 = arith.constant 0 : i32
    return %arg0, %c0_i32 : i32, i32
  }
  func.func @transform_3(%arg0: i32, %arg1: i32, %arg2: memref<1xi32, #tpu.memory_space<smem>>, %arg3: memref<1xi32, #tpu.memory_space<smem>>) -> (i32, i32) {
    %c0_i32 = arith.constant 0 : i32
    %c0_i32_0 = arith.constant 0 : i32
    return %arg0, %c0_i32 : i32, i32
  }
}

</mosaic_0001>

<llo_original>
// kernel: gin_layer_forward.2
$region0: #{gin_layer_forward.2}
  #allocation0 [shape = 'u32[]', space=smem, size = 0x4, offset = 0x4, fixed_abs, tag = 'smem constant byte address 0x4 - core index']
  #allocation1 [shape = 'u32[72,128]{1,0:T(1,128)}', space=vmem, size = 0x9000, scoped, tag = 'internal scratch']
  %s0 = inlined_call_operand.vmem [shape: f32[128,16], index: 0, kind: input, shape index: {}]
  %s1 = inlined_call_operand.vmem [shape: f32[16,128], index: 1, kind: input, shape index: {}]
  %s2 = inlined_call_operand.vmem [shape: f32[1,128], index: 2, kind: input, shape index: {}]
  %s3 = inlined_call_operand.vmem [shape: f32[128,128], index: 3, kind: output, shape index: {0}]
  %s4 = inlined_call_operand.vmem [shape: bf16[128,128], index: 4, kind: output, shape index: {1}]
  %5 = xla_tuple %s3, %s4
  %s6 = sld [smem:[#allocation0]]
  $region30: #{gin_layer_forward.2} parent=0
    _
  %s8 = ssub.s32 1, %s6
  %s9 = scalar_select 0, %s8, %s6
  // Predicated region
  $region2: #{gin_layer_forward.2} parent=0 // pred_check
    _
  $region3: #{gin_layer_forward.2} parent=0 // pred_check_branch
    %11 = sbr.rel (0) target = $region5
  $region4: #{gin_layer_forward.2} parent=0 // pred_region
    _
  $region5: #{gin_layer_forward.2} parent=0 // pred_fallthru
    _
  // Predicated region
  $region6: #{gin_layer_forward.2} parent=0 // pred_check
    _
  $region7: #{gin_layer_forward.2} parent=0 // pred_check_branch
    %13 = sbr.rel (0) target = $region9
  $region8: #{gin_layer_forward.2} parent=0 // pred_region
    _
  $region9: #{gin_layer_forward.2} parent=0 // pred_fallthru
    _
  // Predicated region
  $region10: #{gin_layer_forward.2} parent=0 // pred_check
    _
  $region11: #{gin_layer_forward.2} parent=0 // pred_check_branch
    %15 = sbr.rel (0) target = $region13
  $region12: #{gin_layer_forward.2} parent=0 // pred_region
    _
  $region13: #{gin_layer_forward.2} parent=0 // pred_fallthru
    _
  %v16 = vld [vmem:[%s0] sm:$0xff]
  %v17 = vld [vmem:[%s0 + $0x8] sm:$0xff]
  %v18 = vld [vmem:[%s0 + $0x10] sm:$0xff]
  %v19 = vld [vmem:[%s0 + $0x18] sm:$0xff]
  %v20 = vld [vmem:[%s0 + $0x20] sm:$0xff]
  %v21 = vld [vmem:[%s0 + $0x28] sm:$0xff]
  %v22 = vld [vmem:[%s0 + $0x30] sm:$0xff]
  %v23 = vld [vmem:[%s0 + $0x38] sm:$0xff]
  %v24 = vld [vmem:[%s0 + $0x40] sm:$0xff]
  %v25 = vld [vmem:[%s0 + $0x48] sm:$0xff]
  %v26 = vld [vmem:[%s0 + $0x50] sm:$0xff]
  %v27 = vld [vmem:[%s0 + $0x58] sm:$0xff]
  %v28 = vld [vmem:[%s0 + $0x60] sm:$0xff]
  %v29 = vld [vmem:[%s0 + $0x68] sm:$0xff]
  %v30 = vld [vmem:[%s0 + $0x70] sm:$0xff]
  %v31 = vld [vmem:[%s0 + $0x78] sm:$0xff]
  %v32 = vld [vmem:[%s1] sm:$0xff]
  %v33 = vld [vmem:[%s1 + $0x8] sm:$0xff]
  %v34 = vld [vmem:[%s2] sm:$0x1]
  %v36 = vperm.slane %v34, 0
  %vm38 = vcmask 130048
  %v40 = vsel %vm38, %v16, 0
  %v43 = vsel %vm38, %v17, 0
  %v46 = vsel %vm38, %v18, 0
  %v49 = vsel %vm38, %v19, 0
  %v52 = vsel %vm38, %v20, 0
  %v55 = vsel %vm38, %v21, 0
  %v58 = vsel %vm38, %v22, 0
  %v61 = vsel %vm38, %v23, 0
  %v64 = vsel %vm38, %v24, 0
  %v67 = vsel %vm38, %v25, 0
  %v70 = vsel %vm38, %v26, 0
  %v73 = vsel %vm38, %v27, 0
  %v76 = vsel %vm38, %v28, 0
  %v79 = vsel %vm38, %v29, 0
  %v82 = vsel %vm38, %v30, 0
  %v85 = vsel %vm38, %v31, 0
  %87 = vmatpush.msra.mxu0 0.0
  %88 = vmatpush.msra.mxu0 0.0
  %89 = vmatpush.msra.mxu0 0.0
  %90 = vmatpush.msra.mxu0 0.0
  %91 = vmatpush.msra.mxu0 0.0
  %92 = vmatpush.msra.mxu0 0.0
  %93 = vmatpush.msra.mxu0 0.0
  %94 = vmatpush.msra.mxu0 0.0
  %95 = vmatpush.msra.mxu0 0.0
  %96 = vmatpush.msra.mxu0 0.0
  %97 = vmatpush.msra.mxu0 0.0
  %98 = vmatpush.msra.mxu0 0.0
  %99 = vmatpush.msra.mxu0 0.0
  %100 = vmatpush.msra.mxu0 0.0
  %101 = vmatpush.msra.mxu0 %v33
  %102 = vmatpush.msra.mxu0 %v32
  %103 = vmatmul.f32.gmra.mxu0 %v40
  %v104 = vpop.f32.mrf.mxu0
  %v105 = vadd.f32 %v36, %v104
  %106 = vmatmul.f32.gmra.mxu0 %v43
  %v107 = vpop.f32.mrf.mxu0
  %v108 = vadd.f32 %v36, %v107
  %109 = vmatmul.f32.gmra.mxu0 %v46
  %v110 = vpop.f32.mrf.mxu0
  %v111 = vadd.f32 %v36, %v110
  %112 = vmatmul.f32.gmra.mxu0 %v49
  %v113 = vpop.f32.mrf.mxu0
  %v114 = vadd.f32 %v36, %v113
  %115 = vmatmul.f32.gmra.mxu0 %v52
  %v116 = vpop.f32.mrf.mxu0
  %v117 = vadd.f32 %v36, %v116
  %118 = vmatmul.f32.gmra.mxu0 %v55
  %v119 = vpop.f32.mrf.mxu0
  %v120 = vadd.f32 %v36, %v119
  %121 = vmatmul.f32.gmra.mxu0 %v58
  %v122 = vpop.f32.mrf.mxu0
  %v123 = vadd.f32 %v36, %v122
  %124 = vmatmul.f32.gmra.mxu0 %v61
  %v125 = vpop.f32.mrf.mxu0
  %v126 = vadd.f32 %v36, %v125
  %127 = vmatmul.f32.gmra.mxu0 %v64
  %v128 = vpop.f32.mrf.mxu0
  %v129 = vadd.f32 %v36, %v128
  %130 = vmatmul.f32.gmra.mxu0 %v67
  %v131 = vpop.f32.mrf.mxu0
  %v132 = vadd.f32 %v36, %v131
  %133 = vmatmul.f32.gmra.mxu0 %v70
  %v134 = vpop.f32.mrf.mxu0
  %v135 = vadd.f32 %v36, %v134
  %136 = vmatmul.f32.gmra.mxu0 %v73
  %v137 = vpop.f32.mrf.mxu0
  %v138 = vadd.f32 %v36, %v137
  %139 = vmatmul.f32.gmra.mxu0 %v76
  %v140 = vpop.f32.mrf.mxu0
  %v141 = vadd.f32 %v36, %v140
  %142 = vmatmul.f32.gmra.mxu0 %v79
  %v143 = vpop.f32.mrf.mxu0
  %v144 = vadd.f32 %v36, %v143
  %145 = vmatmul.f32.gmra.mxu0 %v82
  %v146 = vpop.f32.mrf.mxu0
  %v147 = vadd.f32 %v36, %v146
  %148 = vmatmul.f32.gmra.mxu0 %v85
  %v149 = vpop.f32.mrf.mxu0
  %v150 = vadd.f32 %v36, %v149
  %151 = vdwg.mxu0
  %v152 = vlaneseq
  %v153 = vshrl.u32 %v152, 7
  %v154 = vadd.s32 %v153, 8
  %v155 = vadd.s32 %v153, 16
  %v156 = vadd.s32 %v153, 24
  %v157 = vadd.s32 %v153, 32
  %v158 = vadd.s32 %v153, 40
  %v159 = vadd.s32 %v153, 48
  %v160 = vadd.s32 %v153, 56
  %v161 = vadd.s32 %v153, 64
  %v162 = vadd.s32 %v153, 72
  %v163 = vadd.s32 %v153, 80
  %v164 = vadd.s32 %v153, 88
  %v165 = vadd.s32 %v153, 96
  %v166 = vadd.s32 %v153, 104
  %v167 = vadd.s32 %v153, 112
  %v168 = vadd.s32 %v153, 120
  %s169 = smul.u32 0, 128
  %v170 = vstv %s169
  %v171 = vadd.s32 %v153, %v170
  %v172 = vadd.s32 %v154, %v170
  %v173 = vadd.s32 %v155, %v170
  %v174 = vadd.s32 %v156, %v170
  %v175 = vadd.s32 %v157, %v170
  %v176 = vadd.s32 %v158, %v170
  %v177 = vadd.s32 %v159, %v170
  %v178 = vadd.s32 %v160, %v170
  %v179 = vadd.s32 %v161, %v170
  %v180 = vadd.s32 %v162, %v170
  %v181 = vadd.s32 %v163, %v170
  %v182 = vadd.s32 %v164, %v170
  %v183 = vadd.s32 %v165, %v170
  %v184 = vadd.s32 %v166, %v170
  %v185 = vadd.s32 %v167, %v170
  %v186 = vadd.s32 %v168, %v170
  %vm187 = vcmp.eq.s32.totalorder %v171, 0
  %vm188 = vcmp.eq.s32.totalorder %v172, 0
  %vm189 = vcmp.eq.s32.totalorder %v173, 0
  %vm190 = vcmp.eq.s32.totalorder %v174, 0
  %vm191 = vcmp.eq.s32.totalorder %v175, 0
  %vm192 = vcmp.eq.s32.totalorder %v176, 0
  %vm193 = vcmp.eq.s32.totalorder %v177, 0
  %vm194 = vcmp.eq.s32.totalorder %v178, 0
  %vm195 = vcmp.eq.s32.totalorder %v179, 0
  %vm196 = vcmp.eq.s32.totalorder %v180, 0
  %vm197 = vcmp.eq.s32.totalorder %v181, 0
  %vm198 = vcmp.eq.s32.totalorder %v182, 0
  %vm199 = vcmp.eq.s32.totalorder %v183, 0
  %vm200 = vcmp.eq.s32.totalorder %v184, 0
  %vm201 = vcmp.eq.s32.totalorder %v185, 0
  %vm202 = vcmp.eq.s32.totalorder %v186, 0
  %v203 = vsel %vm187, 1, 0
  %v204 = vsel %vm188, 1, 0
  %v205 = vsel %vm189, 1, 0
  %v206 = vsel %vm190, 1, 0
  %v207 = vsel %vm191, 1, 0
  %v208 = vsel %vm192, 1, 0
  %v209 = vsel %vm193, 1, 0
  %v210 = vsel %vm194, 1, 0
  %v211 = vsel %vm195, 1, 0
  %v212 = vsel %vm196, 1, 0
  %v213 = vsel %vm197, 1, 0
  %v214 = vsel %vm198, 1, 0
  %v215 = vsel %vm199, 1, 0
  %v216 = vsel %vm200, 1, 0
  %v217 = vsel %vm201, 1, 0
  %v218 = vsel %vm202, 1, 0
  %vm219 = vcmp.eq.s32.totalorder %v203, 1
  %vm220 = vcmp.eq.s32.totalorder %v204, 1
  %vm221 = vcmp.eq.s32.totalorder %v205, 1
  %vm222 = vcmp.eq.s32.totalorder %v206, 1
  %vm223 = vcmp.eq.s32.totalorder %v207, 1
  %vm224 = vcmp.eq.s32.totalorder %v208, 1
  %vm225 = vcmp.eq.s32.totalorder %v209, 1
  %vm226 = vcmp.eq.s32.totalorder %v210, 1
  %vm227 = vcmp.eq.s32.totalorder %v211, 1
  %vm228 = vcmp.eq.s32.totalorder %v212, 1
  %vm229 = vcmp.eq.s32.totalorder %v213, 1
  %vm230 = vcmp.eq.s32.totalorder %v214, 1
  %vm231 = vcmp.eq.s32.totalorder %v215, 1
  %vm232 = vcmp.eq.s32.totalorder %v216, 1
  %vm233 = vcmp.eq.s32.totalorder %v217, 1
  %vm234 = vcmp.eq.s32.totalorder %v218, 1
  %v235 = vsel %vm219, 0.0, %v105
  %v236 = vsel %vm220, 0.0, %v108
  %v237 = vsel %vm221, 0.0, %v111
  %v238 = vsel %vm222, 0.0, %v114
  %v239 = vsel %vm223, 0.0, %v117
  %v240 = vsel %vm224, 0.0, %v120
  %v241 = vsel %vm225, 0.0, %v123
  %v242 = vsel %vm226, 0.0, %v126
  %v243 = vsel %vm227, 0.0, %v129
  %v244 = vsel %vm228, 0.0, %v132
  %v245 = vsel %vm229, 0.0, %v135
  %v246 = vsel %vm230, 0.0, %v138
  %v247 = vsel %vm231, 0.0, %v141
  %v248 = vsel %vm232, 0.0, %v144
  %v249 = vsel %vm233, 0.0, %v147
  %v250 = vsel %vm234, 0.0, %v150
  %251 = vst [vmem:[%s3] sm:$0xff] %v235
  %252 = vst [vmem:[%s3 + $0x8] sm:$0xff] %v236
  %253 = vst [vmem:[%s3 + $0x10] sm:$0xff] %v237
  %254 = vst [vmem:[%s3 + $0x18] sm:$0xff] %v238
  %255 = vst [vmem:[%s3 + $0x20] sm:$0xff] %v239
  %256 = vst [vmem:[%s3 + $0x28] sm:$0xff] %v240
  %257 = vst [vmem:[%s3 + $0x30] sm:$0xff] %v241
  %258 = vst [vmem:[%s3 + $0x38] sm:$0xff] %v242
  %259 = vst [vmem:[%s3 + $0x40] sm:$0xff] %v243
  %260 = vst [vmem:[%s3 + $0x48] sm:$0xff] %v244
  %261 = vst [vmem:[%s3 + $0x50] sm:$0xff] %v245
  %262 = vst [vmem:[%s3 + $0x58] sm:$0xff] %v246
  %263 = vst [vmem:[%s3 + $0x60] sm:$0xff] %v247
  %264 = vst [vmem:[%s3 + $0x68] sm:$0xff] %v248
  %265 = vst [vmem:[%s3 + $0x70] sm:$0xff] %v249
  %266 = vst [vmem:[%s3 + $0x78] sm:$0xff] %v250
  %v267 = vpack.c.bf16 %v235, %v235
  %v268 = vpack.c.bf16 %v236, %v236
  %v269 = vpack.c.bf16 %v237, %v237
  %v270 = vpack.c.bf16 %v238, %v238
  %v271 = vpack.c.bf16 %v239, %v239
  %v272 = vpack.c.bf16 %v240, %v240
  %v273 = vpack.c.bf16 %v241, %v241
  %v274 = vpack.c.bf16 %v242, %v242
  %v275 = vpack.c.bf16 %v243, %v243
  %v276 = vpack.c.bf16 %v244, %v244
  %v277 = vpack.c.bf16 %v245, %v245
  %v278 = vpack.c.bf16 %v246, %v246
  %v279 = vpack.c.bf16 %v247, %v247
  %v280 = vpack.c.bf16 %v248, %v248
  %v281 = vpack.c.bf16 %v249, %v249
  %v282 = vpack.c.bf16 %v250, %v250
  %283 = vst [vmem:[%s4] sm:$0xf] %v267
  %284 = vst [vmem:[%s4 + $0x4] sm:$0xf] %v268
  %285 = vst [vmem:[%s4 + $0x8] sm:$0xf] %v269
  %286 = vst [vmem:[%s4 + $0xc] sm:$0xf] %v270
  %287 = vst [vmem:[%s4 + $0x10] sm:$0xf] %v271
  %288 = vst [vmem:[%s4 + $0x14] sm:$0xf] %v272
  %289 = vst [vmem:[%s4 + $0x18] sm:$0xf] %v273
  %290 = vst [vmem:[%s4 + $0x1c] sm:$0xf] %v274
  %291 = vst [vmem:[%s4 + $0x20] sm:$0xf] %v275
  %292 = vst [vmem:[%s4 + $0x24] sm:$0xf] %v276
  %293 = vst [vmem:[%s4 + $0x28] sm:$0xf] %v277
  %294 = vst [vmem:[%s4 + $0x2c] sm:$0xf] %v278
  %295 = vst [vmem:[%s4 + $0x30] sm:$0xf] %v279
  %296 = vst [vmem:[%s4 + $0x34] sm:$0xf] %v280
  %297 = vst [vmem:[%s4 + $0x38] sm:$0xf] %v281
  %298 = vst [vmem:[%s4 + $0x3c] sm:$0xf] %v282
  // Predicated region
  $region14: #{gin_layer_forward.2} parent=0 // pred_check
    _
  $region15: #{gin_layer_forward.2} parent=0 // pred_check_branch
    %300 = sbr.rel (0) target = $region17
  $region16: #{gin_layer_forward.2} parent=0 // pred_region
    _
  $region17: #{gin_layer_forward.2} parent=0 // pred_fallthru
    _
  // Predicated region
  $region18: #{gin_layer_forward.2} parent=0 // pred_check
    _
  $region19: #{gin_layer_forward.2} parent=0 // pred_check_branch
    %302 = sbr.rel (0) target = $region21
  $region20: #{gin_layer_forward.2} parent=0 // pred_region
    _
  $region21: #{gin_layer_forward.2} parent=0 // pred_fallthru
    _
  // Predicated region
  $region22: #{gin_layer_forward.2} parent=0 // pred_check
    _
  $region23: #{gin_layer_forward.2} parent=0 // pred_check_branch
    %304 = sbr.rel (0) target = $region25
  $region24: #{gin_layer_forward.2} parent=0 // pred_region
    _
  $region25: #{gin_layer_forward.2} parent=0 // pred_fallthru
    _
  // Predicated region
  $region26: #{gin_layer_forward.2} parent=0 // pred_check
    _
  $region27: #{gin_layer_forward.2} parent=0 // pred_check_branch
    %306 = sbr.rel (0) target = $region29
  $region28: #{gin_layer_forward.2} parent=0 // pred_region
    _
  $region29: #{gin_layer_forward.2} parent=0 // pred_fallthru
    _

// kernel: gin_layer_forward.3
$region0: #{gin_layer_forward.3}
  #allocation0 [shape = 'u32[]', space=smem, size = 0x4, offset = 0x4, fixed_abs, tag = 'smem constant byte address 0x4 - core index']
  #allocation1 [shape = 'u32[72,128]{1,0:T(1,128)}', space=vmem, size = 0x9000, scoped, tag = 'internal scratch']
  #allocation2 [shape = 'f32[128,128]{1,0:T(8,128)}', space=vmem, size = 0x10000, scoped, tag = 'scratch operand']
  #allocation3 [shape = 's32[1]{0}', space=sflag, size = 0x4, scoped, tag = 'scoped memory for gin_layer_forward.3']
  #allocation4 [shape = 's32[1]{0:T(128)S(6)}', space=smem, size = 0x200, scoped, tag = 'prefetched SMEM operand 0']
  #allocation5 [shape = 's32[1]{0:T(128)S(6)}', space=smem, size = 0x200, scoped, tag = 'prefetched SMEM operand 1']
  %s0 = inlined_call_operand.<no memory space> [shape: s32[1], index: 0, kind: input, shape index: {}]
  %s1 = inlined_call_operand.<no memory space> [shape: s32[1], index: 1, kind: input, shape index: {}]
  %s2 = inlined_call_operand.vmem [shape: s32[128,6], index: 2, kind: input, shape index: {}]
  %s3 = inlined_call_operand.vmem [shape: bf16[128,128], index: 3, kind: input, shape index: {}]
  %s4 = inlined_call_operand.vmem [shape: f32[128,128], index: 4, kind: input, shape index: {}]
  %s5 = inlined_call_operand.vmem [shape: f32[128,128], index: 5, kind: output, shape index: {}]
  %s6 = sld [smem:[#allocation0]]
  $region34: #{gin_layer_forward.3} parent=0
    _
  %s8 = ssub.s32 1, %s6
  %s9 = scalar_select 0, %s8, %s6
  %10 = sst [smem:[#allocation4]] %s0
  %11 = sst [smem:[#allocation5]] %s1
  // Predicated region
  $region2: #{gin_layer_forward.3} parent=0 // pred_check
    _
  $region3: #{gin_layer_forward.3} parent=0 // pred_check_branch
    %13 = sbr.rel (0) target = $region5
  $region4: #{gin_layer_forward.3} parent=0 // pred_region
    _
  $region5: #{gin_layer_forward.3} parent=0 // pred_fallthru
    _
  // Predicated region
  $region6: #{gin_layer_forward.3} parent=0 // pred_check
    _
  $region7: #{gin_layer_forward.3} parent=0 // pred_check_branch
    %15 = sbr.rel (0) target = $region9
  $region8: #{gin_layer_forward.3} parent=0 // pred_region
    _
  $region9: #{gin_layer_forward.3} parent=0 // pred_fallthru
    _
  // Predicated region
  $region10: #{gin_layer_forward.3} parent=0 // pred_check
    _
  $region11: #{gin_layer_forward.3} parent=0 // pred_check_branch
    %17 = sbr.rel (0) target = $region13
  $region12: #{gin_layer_forward.3} parent=0 // pred_region
    _
  $region13: #{gin_layer_forward.3} parent=0 // pred_fallthru
    _
  %p18 = scmp.eq.s32.totalorder 0, 0
  // Predicated region
  $region14: #{gin_layer_forward.3} parent=0 // pred_check
    %p19 = pneg %p18
  $region15: #{gin_layer_forward.3} parent=0 // pred_check_branch
    %21 = sbr.rel (%p19) target = $region17
  $region16: #{gin_layer_forward.3} parent=0 // pred_region
    %v22 = vld [vmem:[%s4] sm:$0xff]
    %v23 = vld [vmem:[%s4 + $0x8] sm:$0xff]
    %v24 = vld [vmem:[%s4 + $0x10] sm:$0xff]
    %v25 = vld [vmem:[%s4 + $0x18] sm:$0xff]
    %v26 = vld [vmem:[%s4 + $0x20] sm:$0xff]
    %v27 = vld [vmem:[%s4 + $0x28] sm:$0xff]
    %v28 = vld [vmem:[%s4 + $0x30] sm:$0xff]
    %v29 = vld [vmem:[%s4 + $0x38] sm:$0xff]
    %v30 = vld [vmem:[%s4 + $0x40] sm:$0xff]
    %v31 = vld [vmem:[%s4 + $0x48] sm:$0xff]
    %v32 = vld [vmem:[%s4 + $0x50] sm:$0xff]
    %v33 = vld [vmem:[%s4 + $0x58] sm:$0xff]
    %v34 = vld [vmem:[%s4 + $0x60] sm:$0xff]
    %v35 = vld [vmem:[%s4 + $0x68] sm:$0xff]
    %v36 = vld [vmem:[%s4 + $0x70] sm:$0xff]
    %v37 = vld [vmem:[%s4 + $0x78] sm:$0xff]
    %38 = vst [vmem:[#allocation2] sm:$0xff] %v22
    %39 = vst [vmem:[#allocation2 + $0x8] sm:$0xff] %v23
    %40 = vst [vmem:[#allocation2 + $0x10] sm:$0xff] %v24
    %41 = vst [vmem:[#allocation2 + $0x18] sm:$0xff] %v25
    %42 = vst [vmem:[#allocation2 + $0x20] sm:$0xff] %v26
    %43 = vst [vmem:[#allocation2 + $0x28] sm:$0xff] %v27
    %44 = vst [vmem:[#allocation2 + $0x30] sm:$0xff] %v28
    %45 = vst [vmem:[#allocation2 + $0x38] sm:$0xff] %v29
    %46 = vst [vmem:[#allocation2 + $0x40] sm:$0xff] %v30
    %47 = vst [vmem:[#allocation2 + $0x48] sm:$0xff] %v31
    %48 = vst [vmem:[#allocation2 + $0x50] sm:$0xff] %v32
    %49 = vst [vmem:[#allocation2 + $0x58] sm:$0xff] %v33
    %50 = vst [vmem:[#allocation2 + $0x60] sm:$0xff] %v34
    %51 = vst [vmem:[#allocation2 + $0x68] sm:$0xff] %v35
    %52 = vst [vmem:[#allocation2 + $0x70] sm:$0xff] %v36
    %53 = vst [vmem:[#allocation2 + $0x78] sm:$0xff] %v37
  $region17: #{gin_layer_forward.3} parent=0 // pred_fallthru
    _
  %s54 = smul.u32 0, 128
  %s55 = sld [smem:[#allocation4]]
  %s56 = sadd.s32 %s54, 128
  %p57 = scmp.lt.s32.totalorder %s55, %s56
  %s58 = sld [smem:[#allocation5]]
  %p59 = scmp.ge.s32.totalorder %s58, %s54
  %p60 = pnand %p57, %p59
  %p61 = pneg %p60
  // Predicated region
  $region18: #{gin_layer_forward.3} parent=0 // pred_check
    _
  $region19: #{gin_layer_forward.3} parent=0 // pred_check_branch
    %63 = sbr.rel (%p60) target = $region21
  $region20: #{gin_layer_forward.3} parent=0 // pred_region
    %v64 = vld [vmem:[%s2] sm:$0xff]
    %v65 = vld [vmem:[%s2 + $0x8] sm:$0xff]
    %v66 = vld [vmem:[%s2 + $0x10] sm:$0xff]
    %v67 = vld [vmem:[%s2 + $0x18] sm:$0xff]
    %v68 = vld [vmem:[%s2 + $0x20] sm:$0xff]
    %v69 = vld [vmem:[%s2 + $0x28] sm:$0xff]
    %v70 = vld [vmem:[%s2 + $0x30] sm:$0xff]
    %v71 = vld [vmem:[%s2 + $0x38] sm:$0xff]
    %v72 = vld [vmem:[%s2 + $0x40] sm:$0xff]
    %v73 = vld [vmem:[%s2 + $0x48] sm:$0xff]
    %v74 = vld [vmem:[%s2 + $0x50] sm:$0xff]
    %v75 = vld [vmem:[%s2 + $0x58] sm:$0xff]
    %v76 = vld [vmem:[%s2 + $0x60] sm:$0xff]
    %v77 = vld [vmem:[%s2 + $0x68] sm:$0xff]
    %v78 = vld [vmem:[%s2 + $0x70] sm:$0xff]
    %v79 = vld [vmem:[%s2 + $0x78] sm:$0xff]
    %v80 = vlaneseq
    %v81 = vand.u32 %v80, 127
    %v82 = vstv %s54
    %v83 = vadd.s32 %v81, %v82
    %84 = vset.pattern.permute.xlu0 0
    %85 = vperm.xlu0 %84, %v64
    %v86 = vpop.permute.xlu0 %85
    %87 = vset.pattern.permute.xlu0 0
    %88 = vperm.xlu0 %87, %v65
    %v89 = vpop.permute.xlu0 %88
    %90 = vset.pattern.permute.xlu0 0
    %91 = vperm.xlu0 %90, %v66
    %v92 = vpop.permute.xlu0 %91
    %93 = vset.pattern.permute.xlu0 0
    %94 = vperm.xlu0 %93, %v67
    %v95 = vpop.permute.xlu0 %94
    %96 = vset.pattern.permute.xlu0 0
    %97 = vperm.xlu0 %96, %v68
    %v98 = vpop.permute.xlu0 %97
    %99 = vset.pattern.permute.xlu0 0
    %100 = vperm.xlu0 %99, %v69
    %v101 = vpop.permute.xlu0 %100
    %102 = vset.pattern.permute.xlu0 0
    %103 = vperm.xlu0 %102, %v70
    %v104 = vpop.permute.xlu0 %103
    %105 = vset.pattern.permute.xlu0 0
    %106 = vperm.xlu0 %105, %v71
    %v107 = vpop.permute.xlu0 %106
    %108 = vset.pattern.permute.xlu0 0
    %109 = vperm.xlu0 %108, %v72
    %v110 = vpop.permute.xlu0 %109
    %111 = vset.pattern.permute.xlu0 0
    %112 = vperm.xlu0 %111, %v73
    %v113 = vpop.permute.xlu0 %112
    %114 = vset.pattern.permute.xlu0 0
    %115 = vperm.xlu0 %114, %v74
    %v116 = vpop.permute.xlu0 %115
    %117 = vset.pattern.permute.xlu0 0
    %118 = vperm.xlu0 %117, %v75
    %v119 = vpop.permute.xlu0 %118
    %120 = vset.pattern.permute.xlu0 0
    %121 = vperm.xlu0 %120, %v76
    %v122 = vpop.permute.xlu0 %121
    %123 = vset.pattern.permute.xlu0 0
    %124 = vperm.xlu0 %123, %v77
    %v125 = vpop.permute.xlu0 %124
    %126 = vset.pattern.permute.xlu0 0
    %127 = vperm.xlu0 %126, %v78
    %v128 = vpop.permute.xlu0 %127
    %129 = vset.pattern.permute.xlu0 0
    %130 = vperm.xlu0 %129, %v79
    %v131 = vpop.permute.xlu0 %130
    %vm132 = vcmp.eq.s32.totalorder %v86, %v83
    %vm133 = vcmp.eq.s32.totalorder %v89, %v83
    %vm134 = vcmp.eq.s32.totalorder %v92, %v83
    %vm135 = vcmp.eq.s32.totalorder %v95, %v83
    %vm136 = vcmp.eq.s32.totalorder %v98, %v83
    %vm137 = vcmp.eq.s32.totalorder %v101, %v83
    %vm138 = vcmp.eq.s32.totalorder %v104, %v83
    %vm139 = vcmp.eq.s32.totalorder %v107, %v83
    %vm140 = vcmp.eq.s32.totalorder %v110, %v83
    %vm141 = vcmp.eq.s32.totalorder %v113, %v83
    %vm142 = vcmp.eq.s32.totalorder %v116, %v83
    %vm143 = vcmp.eq.s32.totalorder %v119, %v83
    %vm144 = vcmp.eq.s32.totalorder %v122, %v83
    %vm145 = vcmp.eq.s32.totalorder %v125, %v83
    %vm146 = vcmp.eq.s32.totalorder %v128, %v83
    %vm147 = vcmp.eq.s32.totalorder %v131, %v83
    %v148 = vsel %vm132, 1, 0
    %v149 = vsel %vm133, 1, 0
    %v150 = vsel %vm134, 1, 0
    %v151 = vsel %vm135, 1, 0
    %v152 = vsel %vm136, 1, 0
    %v153 = vsel %vm137, 1, 0
    %v154 = vsel %vm138, 1, 0
    %v155 = vsel %vm139, 1, 0
    %v156 = vsel %vm140, 1, 0
    %v157 = vsel %vm141, 1, 0
    %v158 = vsel %vm142, 1, 0
    %v159 = vsel %vm143, 1, 0
    %v160 = vsel %vm144, 1, 0
    %v161 = vsel %vm145, 1, 0
    %v162 = vsel %vm146, 1, 0
    %v163 = vsel %vm147, 1, 0
    %164 = vset.pattern.permute.xlu0 1
    %165 = vperm.xlu0 %164, %v64
    %v166 = vpop.permute.xlu0 %165
    %167 = vset.pattern.permute.xlu0 1
    %168 = vperm.xlu0 %167, %v65
    %v169 = vpop.permute.xlu0 %168
    %170 = vset.pattern.permute.xlu0 1
    %171 = vperm.xlu0 %170, %v66
    %v172 = vpop.permute.xlu0 %171
    %173 = vset.pattern.permute.xlu0 1
    %174 = vperm.xlu0 %173, %v67
    %v175 = vpop.permute.xlu0 %174
    %176 = vset.pattern.permute.xlu0 1
    %177 = vperm.xlu0 %176, %v68
    %v178 = vpop.permute.xlu0 %177
    %179 = vset.pattern.permute.xlu0 1
    %180 = vperm.xlu0 %179, %v69
    %v181 = vpop.permute.xlu0 %180
    %182 = vset.pattern.permute.xlu0 1
    %183 = vperm.xlu0 %182, %v70
    %v184 = vpop.permute.xlu0 %183
    %185 = vset.pattern.permute.xlu0 1
    %186 = vperm.xlu0 %185, %v71
    %v187 = vpop.permute.xlu0 %186
    %188 = vset.pattern.permute.xlu0 1
    %189 = vperm.xlu0 %188, %v72
    %v190 = vpop.permute.xlu0 %189
    %191 = vset.pattern.permute.xlu0 1
    %192 = vperm.xlu0 %191, %v73
    %v193 = vpop.permute.xlu0 %192
    %194 = vset.pattern.permute.xlu0 1
    %195 = vperm.xlu0 %194, %v74
    %v196 = vpop.permute.xlu0 %195
    %197 = vset.pattern.permute.xlu0 1
    %198 = vperm.xlu0 %197, %v75
    %v199 = vpop.permute.xlu0 %198
    %200 = vset.pattern.permute.xlu0 1
    %201 = vperm.xlu0 %200, %v76
    %v202 = vpop.permute.xlu0 %201
    %203 = vset.pattern.permute.xlu0 1
    %204 = vperm.xlu0 %203, %v77
    %v205 = vpop.permute.xlu0 %204
    %206 = vset.pattern.permute.xlu0 1
    %207 = vperm.xlu0 %206, %v78
    %v208 = vpop.permute.xlu0 %207
    %209 = vset.pattern.permute.xlu0 1
    %210 = vperm.xlu0 %209, %v79
    %v211 = vpop.permute.xlu0 %210
    %vm212 = vcmp.eq.s32.totalorder %v166, %v83
    %vm213 = vcmp.eq.s32.totalorder %v169, %v83
    %vm214 = vcmp.eq.s32.totalorder %v172, %v83
    %vm215 = vcmp.eq.s32.totalorder %v175, %v83
    %vm216 = vcmp.eq.s32.totalorder %v178, %v83
    %vm217 = vcmp.eq.s32.totalorder %v181, %v83
    %vm218 = vcmp.eq.s32.totalorder %v184, %v83
    %vm219 = vcmp.eq.s32.totalorder %v187, %v83
    %vm220 = vcmp.eq.s32.totalorder %v190, %v83
    %vm221 = vcmp.eq.s32.totalorder %v193, %v83
    %vm222 = vcmp.eq.s32.totalorder %v196, %v83
    %vm223 = vcmp.eq.s32.totalorder %v199, %v83
    %vm224 = vcmp.eq.s32.totalorder %v202, %v83
    %vm225 = vcmp.eq.s32.totalorder %v205, %v83
    %vm226 = vcmp.eq.s32.totalorder %v208, %v83
    %vm227 = vcmp.eq.s32.totalorder %v211, %v83
    %v228 = vsel %vm212, 1, 0
    %v229 = vsel %vm213, 1, 0
    %v230 = vsel %vm214, 1, 0
    %v231 = vsel %vm215, 1, 0
    %v232 = vsel %vm216, 1, 0
    %v233 = vsel %vm217, 1, 0
    %v234 = vsel %vm218, 1, 0
    %v235 = vsel %vm219, 1, 0
    %v236 = vsel %vm220, 1, 0
    %v237 = vsel %vm221, 1, 0
    %v238 = vsel %vm222, 1, 0
    %v239 = vsel %vm223, 1, 0
    %v240 = vsel %vm224, 1, 0
    %v241 = vsel %vm225, 1, 0
    %v242 = vsel %vm226, 1, 0
    %v243 = vsel %vm227, 1, 0
    %v244 = vadd.s32 %v148, %v228
    %v245 = vadd.s32 %v149, %v229
    %v246 = vadd.s32 %v150, %v230
    %v247 = vadd.s32 %v151, %v231
    %v248 = vadd.s32 %v152, %v232
    %v249 = vadd.s32 %v153, %v233
    %v250 = vadd.s32 %v154, %v234
    %v251 = vadd.s32 %v155, %v235
    %v252 = vadd.s32 %v156, %v236
    %v253 = vadd.s32 %v157, %v237
    %v254 = vadd.s32 %v158, %v238
    %v255 = vadd.s32 %v159, %v239
    %v256 = vadd.s32 %v160, %v240
    %v257 = vadd.s32 %v161, %v241
    %v258 = vadd.s32 %v162, %v242
    %v259 = vadd.s32 %v163, %v243
    %260 = vset.pattern.permute.xlu0 2
    %261 = vperm.xlu0 %260, %v64
    %v262 = vpop.permute.xlu0 %261
    %263 = vset.pattern.permute.xlu0 2
    %264 = vperm.xlu0 %263, %v65
    %v265 = vpop.permute.xlu0 %264
    %266 = vset.pattern.permute.xlu0 2
    %267 = vperm.xlu0 %266, %v66
    %v268 = vpop.permute.xlu0 %267
    %269 = vset.pattern.permute.xlu0 2
    %270 = vperm.xlu0 %269, %v67
    %v271 = vpop.permute.xlu0 %270
    %272 = vset.pattern.permute.xlu0 2
    %273 = vperm.xlu0 %272, %v68
    %v274 = vpop.permute.xlu0 %273
    %275 = vset.pattern.permute.xlu0 2
    %276 = vperm.xlu0 %275, %v69
    %v277 = vpop.permute.xlu0 %276
    %278 = vset.pattern.permute.xlu0 2
    %279 = vperm.xlu0 %278, %v70
    %v280 = vpop.permute.xlu0 %279
    %281 = vset.pattern.permute.xlu0 2
    %282 = vperm.xlu0 %281, %v71
    %v283 = vpop.permute.xlu0 %282
    %284 = vset.pattern.permute.xlu0 2
    %285 = vperm.xlu0 %284, %v72
    %v286 = vpop.permute.xlu0 %285
    %287 = vset.pattern.permute.xlu0 2
    %288 = vperm.xlu0 %287, %v73
    %v289 = vpop.permute.xlu0 %288
    %290 = vset.pattern.permute.xlu0 2
    %291 = vperm.xlu0 %290, %v74
    %v292 = vpop.permute.xlu0 %291
    %293 = vset.pattern.permute.xlu0 2
    %294 = vperm.xlu0 %293, %v75
    %v295 = vpop.permute.xlu0 %294
    %296 = vset.pattern.permute.xlu0 2
    %297 = vperm.xlu0 %296, %v76
    %v298 = vpop.permute.xlu0 %297
    %299 = vset.pattern.permute.xlu0 2
    %300 = vperm.xlu0 %299, %v77
    %v301 = vpop.permute.xlu0 %300
    %302 = vset.pattern.permute.xlu0 2
    %303 = vperm.xlu0 %302, %v78
    %v304 = vpop.permute.xlu0 %303
    %305 = vset.pattern.permute.xlu0 2
    %306 = vperm.xlu0 %305, %v79
    %v307 = vpop.permute.xlu0 %306
    %vm308 = vcmp.eq.s32.totalorder %v262, %v83
    %vm309 = vcmp.eq.s32.totalorder %v265, %v83
    %vm310 = vcmp.eq.s32.totalorder %v268, %v83
    %vm311 = vcmp.eq.s32.totalorder %v271, %v83
    %vm312 = vcmp.eq.s32.totalorder %v274, %v83
    %vm313 = vcmp.eq.s32.totalorder %v277, %v83
    %vm314 = vcmp.eq.s32.totalorder %v280, %v83
    %vm315 = vcmp.eq.s32.totalorder %v283, %v83
    %vm316 = vcmp.eq.s32.totalorder %v286, %v83
    %vm317 = vcmp.eq.s32.totalorder %v289, %v83
    %vm318 = vcmp.eq.s32.totalorder %v292, %v83
    %vm319 = vcmp.eq.s32.totalorder %v295, %v83
    %vm320 = vcmp.eq.s32.totalorder %v298, %v83
    %vm321 = vcmp.eq.s32.totalorder %v301, %v83
    %vm322 = vcmp.eq.s32.totalorder %v304, %v83
    %vm323 = vcmp.eq.s32.totalorder %v307, %v83
    %v324 = vsel %vm308, 1, 0
    %v325 = vsel %vm309, 1, 0
    %v326 = vsel %vm310, 1, 0
    %v327 = vsel %vm311, 1, 0
    %v328 = vsel %vm312, 1, 0
    %v329 = vsel %vm313, 1, 0
    %v330 = vsel %vm314, 1, 0
    %v331 = vsel %vm315, 1, 0
    %v332 = vsel %vm316, 1, 0
    %v333 = vsel %vm317, 1, 0
    %v334 = vsel %vm318, 1, 0
    %v335 = vsel %vm319, 1, 0
    %v336 = vsel %vm320, 1, 0
    %v337 = vsel %vm321, 1, 0
    %v338 = vsel %vm322, 1, 0
    %v339 = vsel %vm323, 1, 0
    %v340 = vadd.s32 %v244, %v324
    %v341 = vadd.s32 %v245, %v325
    %v342 = vadd.s32 %v246, %v326
    %v343 = vadd.s32 %v247, %v327
    %v344 = vadd.s32 %v248, %v328
    %v345 = vadd.s32 %v249, %v329
    %v346 = vadd.s32 %v250, %v330
    %v347 = vadd.s32 %v251, %v331
    %v348 = vadd.s32 %v252, %v332
    %v349 = vadd.s32 %v253, %v333
    %v350 = vadd.s32 %v254, %v334
    %v351 = vadd.s32 %v255, %v335
    %v352 = vadd.s32 %v256, %v336
    %v353 = vadd.s32 %v257, %v337
    %v354 = vadd.s32 %v258, %v338
    %v355 = vadd.s32 %v259, %v339
    %356 = vset.pattern.permute.xlu0 3
    %357 = vperm.xlu0 %356, %v64
    %v358 = vpop.permute.xlu0 %357
    %359 = vset.pattern.permute.xlu0 3
    %360 = vperm.xlu0 %359, %v65
    %v361 = vpop.permute.xlu0 %360
    %362 = vset.pattern.permute.xlu0 3
    %363 = vperm.xlu0 %362, %v66
    %v364 = vpop.permute.xlu0 %363
    %365 = vset.pattern.permute.xlu0 3
    %366 = vperm.xlu0 %365, %v67
    %v367 = vpop.permute.xlu0 %366
    %368 = vset.pattern.permute.xlu0 3
    %369 = vperm.xlu0 %368, %v68
    %v370 = vpop.permute.xlu0 %369
    %371 = vset.pattern.permute.xlu0 3
    %372 = vperm.xlu0 %371, %v69
    %v373 = vpop.permute.xlu0 %372
    %374 = vset.pattern.permute.xlu0 3
    %375 = vperm.xlu0 %374, %v70
    %v376 = vpop.permute.xlu0 %375
    %377 = vset.pattern.permute.xlu0 3
    %378 = vperm.xlu0 %377, %v71
    %v379 = vpop.permute.xlu0 %378
    %380 = vset.pattern.permute.xlu0 3
    %381 = vperm.xlu0 %380, %v72
    %v382 = vpop.permute.xlu0 %381
    %383 = vset.pattern.permute.xlu0 3
    %384 = vperm.xlu0 %383, %v73
    %v385 = vpop.permute.xlu0 %384
    %386 = vset.pattern.permute.xlu0 3
    %387 = vperm.xlu0 %386, %v74
    %v388 = vpop.permute.xlu0 %387
    %389 = vset.pattern.permute.xlu0 3
    %390 = vperm.xlu0 %389, %v75
    %v391 = vpop.permute.xlu0 %390
    %392 = vset.pattern.permute.xlu0 3
    %393 = vperm.xlu0 %392, %v76
    %v394 = vpop.permute.xlu0 %393
    %395 = vset.pattern.permute.xlu0 3
    %396 = vperm.xlu0 %395, %v77
    %v397 = vpop.permute.xlu0 %396
    %398 = vset.pattern.permute.xlu0 3
    %399 = vperm.xlu0 %398, %v78
    %v400 = vpop.permute.xlu0 %399
    %401 = vset.pattern.permute.xlu0 3
    %402 = vperm.xlu0 %401, %v79
    %v403 = vpop.permute.xlu0 %402
    %vm404 = vcmp.eq.s32.totalorder %v358, %v83
    %vm405 = vcmp.eq.s32.totalorder %v361, %v83
    %vm406 = vcmp.eq.s32.totalorder %v364, %v83
    %vm407 = vcmp.eq.s32.totalorder %v367, %v83
    %vm408 = vcmp.eq.s32.totalorder %v370, %v83
    %vm409 = vcmp.eq.s32.totalorder %v373, %v83
    %vm410 = vcmp.eq.s32.totalorder %v376, %v83
    %vm411 = vcmp.eq.s32.totalorder %v379, %v83
    %vm412 = vcmp.eq.s32.totalorder %v382, %v83
    %vm413 = vcmp.eq.s32.totalorder %v385, %v83
    %vm414 = vcmp.eq.s32.totalorder %v388, %v83
    %vm415 = vcmp.eq.s32.totalorder %v391, %v83
    %vm416 = vcmp.eq.s32.totalorder %v394, %v83
    %vm417 = vcmp.eq.s32.totalorder %v397, %v83
    %vm418 = vcmp.eq.s32.totalorder %v400, %v83
    %vm419 = vcmp.eq.s32.totalorder %v403, %v83
    %v420 = vsel %vm404, 1, 0
    %v421 = vsel %vm405, 1, 0
    %v422 = vsel %vm406, 1, 0
    %v423 = vsel %vm407, 1, 0
    %v424 = vsel %vm408, 1, 0
    %v425 = vsel %vm409, 1, 0
    %v426 = vsel %vm410, 1, 0
    %v427 = vsel %vm411, 1, 0
    %v428 = vsel %vm412, 1, 0
    %v429 = vsel %vm413, 1, 0
    %v430 = vsel %vm414, 1, 0
    %v431 = vsel %vm415, 1, 0
    %v432 = vsel %vm416, 1, 0
    %v433 = vsel %vm417, 1, 0
    %v434 = vsel %vm418, 1, 0
    %v435 = vsel %vm419, 1, 0
    %v436 = vadd.s32 %v340, %v420
    %v437 = vadd.s32 %v341, %v421
    %v438 = vadd.s32 %v342, %v422
    %v439 = vadd.s32 %v343, %v423
    %v440 = vadd.s32 %v344, %v424
    %v441 = vadd.s32 %v345, %v425
    %v442 = vadd.s32 %v346, %v426
    %v443 = vadd.s32 %v347, %v427
    %v444 = vadd.s32 %v348, %v428
    %v445 = vadd.s32 %v349, %v429
    %v446 = vadd.s32 %v350, %v430
    %v447 = vadd.s32 %v351, %v431
    %v448 = vadd.s32 %v352, %v432
    %v449 = vadd.s32 %v353, %v433
    %v450 = vadd.s32 %v354, %v434
    %v451 = vadd.s32 %v355, %v435
    %452 = vset.pattern.permute.xlu0 4
    %453 = vperm.xlu0 %452, %v64
    %v454 = vpop.permute.xlu0 %453
    %455 = vset.pattern.permute.xlu0 4
    %456 = vperm.xlu0 %455, %v65
    %v457 = vpop.permute.xlu0 %456
    %458 = vset.pattern.permute.xlu0 4
    %459 = vperm.xlu0 %458, %v66
    %v460 = vpop.permute.xlu0 %459
    %461 = vset.pattern.permute.xlu0 4
    %462 = vperm.xlu0 %461, %v67
    %v463 = vpop.permute.xlu0 %462
    %464 = vset.pattern.permute.xlu0 4
    %465 = vperm.xlu0 %464, %v68
    %v466 = vpop.permute.xlu0 %465
    %467 = vset.pattern.permute.xlu0 4
    %468 = vperm.xlu0 %467, %v69
    %v469 = vpop.permute.xlu0 %468
    %470 = vset.pattern.permute.xlu0 4
    %471 = vperm.xlu0 %470, %v70
    %v472 = vpop.permute.xlu0 %471
    %473 = vset.pattern.permute.xlu0 4
    %474 = vperm.xlu0 %473, %v71
    %v475 = vpop.permute.xlu0 %474
    %476 = vset.pattern.permute.xlu0 4
    %477 = vperm.xlu0 %476, %v72
    %v478 = vpop.permute.xlu0 %477
    %479 = vset.pattern.permute.xlu0 4
    %480 = vperm.xlu0 %479, %v73
    %v481 = vpop.permute.xlu0 %480
    %482 = vset.pattern.permute.xlu0 4
    %483 = vperm.xlu0 %482, %v74
    %v484 = vpop.permute.xlu0 %483
    %485 = vset.pattern.permute.xlu0 4
    %486 = vperm.xlu0 %485, %v75
    %v487 = vpop.permute.xlu0 %486
    %488 = vset.pattern.permute.xlu0 4
    %489 = vperm.xlu0 %488, %v76
    %v490 = vpop.permute.xlu0 %489
    %491 = vset.pattern.permute.xlu0 4
    %492 = vperm.xlu0 %491, %v77
    %v493 = vpop.permute.xlu0 %492
    %494 = vset.pattern.permute.xlu0 4
    %495 = vperm.xlu0 %494, %v78
    %v496 = vpop.permute.xlu0 %495
    %497 = vset.pattern.permute.xlu0 4
    %498 = vperm.xlu0 %497, %v79
    %v499 = vpop.permute.xlu0 %498
    %vm500 = vcmp.eq.s32.totalorder %v454, %v83
    %vm501 = vcmp.eq.s32.totalorder %v457, %v83
    %vm502 = vcmp.eq.s32.totalorder %v460, %v83
    %vm503 = vcmp.eq.s32.totalorder %v463, %v83
    %vm504 = vcmp.eq.s32.totalorder %v466, %v83
    %vm505 = vcmp.eq.s32.totalorder %v469, %v83
    %vm506 = vcmp.eq.s32.totalorder %v472, %v83
    %vm507 = vcmp.eq.s32.totalorder %v475, %v83
    %vm508 = vcmp.eq.s32.totalorder %v478, %v83
    %vm509 = vcmp.eq.s32.totalorder %v481, %v83
    %vm510 = vcmp.eq.s32.totalorder %v484, %v83
    %vm511 = vcmp.eq.s32.totalorder %v487, %v83
    %vm512 = vcmp.eq.s32.totalorder %v490, %v83
    %vm513 = vcmp.eq.s32.totalorder %v493, %v83
    %vm514 = vcmp.eq.s32.totalorder %v496, %v83
    %vm515 = vcmp.eq.s32.totalorder %v499, %v83
    %v516 = vsel %vm500, 1, 0
    %v517 = vsel %vm501, 1, 0
    %v518 = vsel %vm502, 1, 0
    %v519 = vsel %vm503, 1, 0
    %v520 = vsel %vm504, 1, 0
    %v521 = vsel %vm505, 1, 0
    %v522 = vsel %vm506, 1, 0
    %v523 = vsel %vm507, 1, 0
    %v524 = vsel %vm508, 1, 0
    %v525 = vsel %vm509, 1, 0
    %v526 = vsel %vm510, 1, 0
    %v527 = vsel %vm511, 1, 0
    %v528 = vsel %vm512, 1, 0
    %v529 = vsel %vm513, 1, 0
    %v530 = vsel %vm514, 1, 0
    %v531 = vsel %vm515, 1, 0
    %v532 = vadd.s32 %v436, %v516
    %v533 = vadd.s32 %v437, %v517
    %v534 = vadd.s32 %v438, %v518
    %v535 = vadd.s32 %v439, %v519
    %v536 = vadd.s32 %v440, %v520
    %v537 = vadd.s32 %v441, %v521
    %v538 = vadd.s32 %v442, %v522
    %v539 = vadd.s32 %v443, %v523
    %v540 = vadd.s32 %v444, %v524
    %v541 = vadd.s32 %v445, %v525
    %v542 = vadd.s32 %v446, %v526
    %v543 = vadd.s32 %v447, %v527
    %v544 = vadd.s32 %v448, %v528
    %v545 = vadd.s32 %v449, %v529
    %v546 = vadd.s32 %v450, %v530
    %v547 = vadd.s32 %v451, %v531
    %548 = vset.pattern.permute.xlu0 5
    %549 = vperm.xlu0 %548, %v64
    %v550 = vpop.permute.xlu0 %549
    %551 = vset.pattern.permute.xlu0 5
    %552 = vperm.xlu0 %551, %v65
    %v553 = vpop.permute.xlu0 %552
    %554 = vset.pattern.permute.xlu0 5
    %555 = vperm.xlu0 %554, %v66
    %v556 = vpop.permute.xlu0 %555
    %557 = vset.pattern.permute.xlu0 5
    %558 = vperm.xlu0 %557, %v67
    %v559 = vpop.permute.xlu0 %558
    %560 = vset.pattern.permute.xlu0 5
    %561 = vperm.xlu0 %560, %v68
    %v562 = vpop.permute.xlu0 %561
    %563 = vset.pattern.permute.xlu0 5
    %564 = vperm.xlu0 %563, %v69
    %v565 = vpop.permute.xlu0 %564
    %566 = vset.pattern.permute.xlu0 5
    %567 = vperm.xlu0 %566, %v70
    %v568 = vpop.permute.xlu0 %567
    %569 = vset.pattern.permute.xlu0 5
    %570 = vperm.xlu0 %569, %v71
    %v571 = vpop.permute.xlu0 %570
    %572 = vset.pattern.permute.xlu0 5
    %573 = vperm.xlu0 %572, %v72
    %v574 = vpop.permute.xlu0 %573
    %575 = vset.pattern.permute.xlu0 5
    %576 = vperm.xlu0 %575, %v73
    %v577 = vpop.permute.xlu0 %576
    %578 = vset.pattern.permute.xlu0 5
    %579 = vperm.xlu0 %578, %v74
    %v580 = vpop.permute.xlu0 %579
    %581 = vset.pattern.permute.xlu0 5
    %582 = vperm.xlu0 %581, %v75
    %v583 = vpop.permute.xlu0 %582
    %584 = vset.pattern.permute.xlu0 5
    %585 = vperm.xlu0 %584, %v76
    %v586 = vpop.permute.xlu0 %585
    %587 = vset.pattern.permute.xlu0 5
    %588 = vperm.xlu0 %587, %v77
    %v589 = vpop.permute.xlu0 %588
    %590 = vset.pattern.permute.xlu0 5
    %591 = vperm.xlu0 %590, %v78
    %v592 = vpop.permute.xlu0 %591
    %593 = vset.pattern.permute.xlu0 5
    %594 = vperm.xlu0 %593, %v79
    %v595 = vpop.permute.xlu0 %594
    %vm596 = vcmp.eq.s32.totalorder %v550, %v83
    %vm597 = vcmp.eq.s32.totalorder %v553, %v83
    %vm598 = vcmp.eq.s32.totalorder %v556, %v83
    %vm599 = vcmp.eq.s32.totalorder %v559, %v83
    %vm600 = vcmp.eq.s32.totalorder %v562, %v83
    %vm601 = vcmp.eq.s32.totalorder %v565, %v83
    %vm602 = vcmp.eq.s32.totalorder %v568, %v83
    %vm603 = vcmp.eq.s32.totalorder %v571, %v83
    %vm604 = vcmp.eq.s32.totalorder %v574, %v83
    %vm605 = vcmp.eq.s32.totalorder %v577, %v83
    %vm606 = vcmp.eq.s32.totalorder %v580, %v83
    %vm607 = vcmp.eq.s32.totalorder %v583, %v83
    %vm608 = vcmp.eq.s32.totalorder %v586, %v83
    %vm609 = vcmp.eq.s32.totalorder %v589, %v83
    %vm610 = vcmp.eq.s32.totalorder %v592, %v83
    %vm611 = vcmp.eq.s32.totalorder %v595, %v83
    %v612 = vsel %vm596, 1, 0
    %v613 = vsel %vm597, 1, 0
    %v614 = vsel %vm598, 1, 0
    %v615 = vsel %vm599, 1, 0
    %v616 = vsel %vm600, 1, 0
    %v617 = vsel %vm601, 1, 0
    %v618 = vsel %vm602, 1, 0
    %v619 = vsel %vm603, 1, 0
    %v620 = vsel %vm604, 1, 0
    %v621 = vsel %vm605, 1, 0
    %v622 = vsel %vm606, 1, 0
    %v623 = vsel %vm607, 1, 0
    %v624 = vsel %vm608, 1, 0
    %v625 = vsel %vm609, 1, 0
    %v626 = vsel %vm610, 1, 0
    %v627 = vsel %vm611, 1, 0
    %v628 = vadd.s32 %v532, %v612
    %v629 = vadd.s32 %v533, %v613
    %v630 = vadd.s32 %v534, %v614
    %v631 = vadd.s32 %v535, %v615
    %v632 = vadd.s32 %v536, %v616
    %v633 = vadd.s32 %v537, %v617
    %v634 = vadd.s32 %v538, %v618
    %v635 = vadd.s32 %v539, %v619
    %v636 = vadd.s32 %v540, %v620
    %v637 = vadd.s32 %v541, %v621
    %v638 = vadd.s32 %v542, %v622
    %v639 = vadd.s32 %v543, %v623
    %v640 = vadd.s32 %v544, %v624
    %v641 = vadd.s32 %v545, %v625
    %v642 = vadd.s32 %v546, %v626
    %v643 = vadd.s32 %v547, %v627
    %v644 = vld [vmem:[#allocation2] sm:$0xff]
    %v645 = vld [vmem:[#allocation2 + $0x8] sm:$0xff]
    %v646 = vld [vmem:[#allocation2 + $0x10] sm:$0xff]
    %v647 = vld [vmem:[#allocation2 + $0x18] sm:$0xff]
    %v648 = vld [vmem:[#allocation2 + $0x20] sm:$0xff]
    %v649 = vld [vmem:[#allocation2 + $0x28] sm:$0xff]
    %v650 = vld [vmem:[#allocation2 + $0x30] sm:$0xff]
    %v651 = vld [vmem:[#allocation2 + $0x38] sm:$0xff]
    %v652 = vld [vmem:[#allocation2 + $0x40] sm:$0xff]
    %v653 = vld [vmem:[#allocation2 + $0x48] sm:$0xff]
    %v654 = vld [vmem:[#allocation2 + $0x50] sm:$0xff]
    %v655 = vld [vmem:[#allocation2 + $0x58] sm:$0xff]
    %v656 = vld [vmem:[#allocation2 + $0x60] sm:$0xff]
    %v657 = vld [vmem:[#allocation2 + $0x68] sm:$0xff]
    %v658 = vld [vmem:[#allocation2 + $0x70] sm:$0xff]
    %v659 = vld [vmem:[#allocation2 + $0x78] sm:$0xff]
    %v660 = vcvt.s32.f32 %v628
    %v661 = vcvt.s32.f32 %v629
    %v662 = vcvt.s32.f32 %v630
    %v663 = vcvt.s32.f32 %v631
    %v664 = vcvt.s32.f32 %v632
    %v665 = vcvt.s32.f32 %v633
    %v666 = vcvt.s32.f32 %v634
    %v667 = vcvt.s32.f32 %v635
    %v668 = vcvt.s32.f32 %v636
    %v669 = vcvt.s32.f32 %v637
    %v670 = vcvt.s32.f32 %v638
    %v671 = vcvt.s32.f32 %v639
    %v672 = vcvt.s32.f32 %v640
    %v673 = vcvt.s32.f32 %v641
    %v674 = vcvt.s32.f32 %v642
    %v675 = vcvt.s32.f32 %v643
    %v676 = vpack.c.bf16 %v661, %v660
    %v677 = vpack.c.bf16 %v663, %v662
    %v678 = vpack.c.bf16 %v665, %v664
    %v679 = vpack.c.bf16 %v667, %v666
    %v680 = vpack.c.bf16 %v669, %v668
    %v681 = vpack.c.bf16 %v671, %v670
    %v682 = vpack.c.bf16 %v673, %v672
    %v683 = vpack.c.bf16 %v675, %v674
    %v684 = vld [vmem:[%s3] sm:$0xf]
    %v685 = vld [vmem:[%s3 + $0x4] sm:$0xf]
    %v686 = vld [vmem:[%s3 + $0x8] sm:$0xf]
    %v687 = vld [vmem:[%s3 + $0xc] sm:$0xf]
    %v688 = vld [vmem:[%s3 + $0x10] sm:$0xf]
    %v689 = vld [vmem:[%s3 + $0x14] sm:$0xf]
    %v690 = vld [vmem:[%s3 + $0x18] sm:$0xf]
    %v691 = vld [vmem:[%s3 + $0x1c] sm:$0xf]
    %v692 = vld [vmem:[%s3 + $0x20] sm:$0xf]
    %v693 = vld [vmem:[%s3 + $0x24] sm:$0xf]
    %v694 = vld [vmem:[%s3 + $0x28] sm:$0xf]
    %v695 = vld [vmem:[%s3 + $0x2c] sm:$0xf]
    %v696 = vld [vmem:[%s3 + $0x30] sm:$0xf]
    %v697 = vld [vmem:[%s3 + $0x34] sm:$0xf]
    %v698 = vld [vmem:[%s3 + $0x38] sm:$0xf]
    %v699 = vld [vmem:[%s3 + $0x3c] sm:$0xf]
    %v716 = vunpack.c.l.b16 %v684
    %v717 = vunpack.c.l.b16 %v685
    %v718 = vunpack.c.l.b16 %v686
    %v719 = vunpack.c.l.b16 %v687
    %v720 = vunpack.c.l.b16 %v688
    %v721 = vunpack.c.l.b16 %v689
    %v722 = vunpack.c.l.b16 %v690
    %v723 = vunpack.c.l.b16 %v691
    %v724 = vunpack.c.l.b16 %v692
    %v725 = vunpack.c.l.b16 %v693
    %v726 = vunpack.c.l.b16 %v694
    %v727 = vunpack.c.l.b16 %v695
    %v728 = vunpack.c.l.b16 %v696
    %v729 = vunpack.c.l.b16 %v697
    %v730 = vunpack.c.l.b16 %v698
    %v731 = vunpack.c.l.b16 %v699
    %v732 = vpack.c.b16 %v717, %v716
    %v733 = vpack.c.b16 %v719, %v718
    %v734 = vpack.c.b16 %v721, %v720
    %v735 = vpack.c.b16 %v723, %v722
    %v736 = vpack.c.b16 %v725, %v724
    %v737 = vpack.c.b16 %v727, %v726
    %v738 = vpack.c.b16 %v729, %v728
    %v739 = vpack.c.b16 %v731, %v730
    %748 = vmatpush.bf16.msra.mxu0 %v739
    %749 = vmatpush.bf16.msra.mxu0 %v738
    %750 = vmatpush.bf16.msra.mxu0 %v737
    %751 = vmatpush.bf16.msra.mxu0 %v736
    %752 = vmatpush.bf16.msra.mxu0 %v735
    %753 = vmatpush.bf16.msra.mxu0 %v734
    %754 = vmatpush.bf16.msra.mxu0 %v733
    %755 = vmatpush.bf16.msra.mxu0 %v732
    %756 = vmatmul.bf16.gmra.mxu0 %v676
    %v757 = vpop.f32.mrf.mxu0
    %v758 = vadd.f32 0.0, %v757
    %v759 = vpop.f32.mrf.mxu0
    %v760 = vadd.f32 0.0, %v759
    %761 = vmatmul.bf16.gmra.mxu0 %v677
    %v762 = vpop.f32.mrf.mxu0
    %v763 = vadd.f32 0.0, %v762
    %v764 = vpop.f32.mrf.mxu0
    %v765 = vadd.f32 0.0, %v764
    %766 = vmatmul.bf16.gmra.mxu0 %v678
    %v767 = vpop.f32.mrf.mxu0
    %v768 = vadd.f32 0.0, %v767
    %v769 = vpop.f32.mrf.mxu0
    %v770 = vadd.f32 0.0, %v769
    %771 = vmatmul.bf16.gmra.mxu0 %v679
    %v772 = vpop.f32.mrf.mxu0
    %v773 = vadd.f32 0.0, %v772
    %v774 = vpop.f32.mrf.mxu0
    %v775 = vadd.f32 0.0, %v774
    %776 = vmatmul.bf16.gmra.mxu0 %v680
    %v777 = vpop.f32.mrf.mxu0
    %v778 = vadd.f32 0.0, %v777
    %v779 = vpop.f32.mrf.mxu0
    %v780 = vadd.f32 0.0, %v779
    %781 = vmatmul.bf16.gmra.mxu0 %v681
    %v782 = vpop.f32.mrf.mxu0
    %v783 = vadd.f32 0.0, %v782
    %v784 = vpop.f32.mrf.mxu0
    %v785 = vadd.f32 0.0, %v784
    %786 = vmatmul.bf16.gmra.mxu0 %v682
    %v787 = vpop.f32.mrf.mxu0
    %v788 = vadd.f32 0.0, %v787
    %v789 = vpop.f32.mrf.mxu0
    %v790 = vadd.f32 0.0, %v789
    %791 = vmatmul.bf16.gmra.mxu0 %v683
    %v792 = vpop.f32.mrf.mxu0
    %v793 = vadd.f32 0.0, %v792
    %v794 = vpop.f32.mrf.mxu0
    %v795 = vadd.f32 0.0, %v794
    %796 = vdwg.mxu0
    %v797 = vadd.f32 %v644, %v758
    %v798 = vadd.f32 %v645, %v760
    %v799 = vadd.f32 %v646, %v763
    %v800 = vadd.f32 %v647, %v765
    %v801 = vadd.f32 %v648, %v768
    %v802 = vadd.f32 %v649, %v770
    %v803 = vadd.f32 %v650, %v773
    %v804 = vadd.f32 %v651, %v775
    %v805 = vadd.f32 %v652, %v778
    %v806 = vadd.f32 %v653, %v780
    %v807 = vadd.f32 %v654, %v783
    %v808 = vadd.f32 %v655, %v785
    %v809 = vadd.f32 %v656, %v788
    %v810 = vadd.f32 %v657, %v790
    %v811 = vadd.f32 %v658, %v793
    %v812 = vadd.f32 %v659, %v795
    %813 = vst [vmem:[#allocation2] sm:$0xff] %v797
    %814 = vst [vmem:[#allocation2 + $0x8] sm:$0xff] %v798
    %815 = vst [vmem:[#allocation2 + $0x10] sm:$0xff] %v799
    %816 = vst [vmem:[#allocation2 + $0x18] sm:$0xff] %v800
    %817 = vst [vmem:[#allocation2 + $0x20] sm:$0xff] %v801
    %818 = vst [vmem:[#allocation2 + $0x28] sm:$0xff] %v802
    %819 = vst [vmem:[#allocation2 + $0x30] sm:$0xff] %v803
    %820 = vst [vmem:[#allocation2 + $0x38] sm:$0xff] %v804
    %821 = vst [vmem:[#allocation2 + $0x40] sm:$0xff] %v805
    %822 = vst [vmem:[#allocation2 + $0x48] sm:$0xff] %v806
    %823 = vst [vmem:[#allocation2 + $0x50] sm:$0xff] %v807
    %824 = vst [vmem:[#allocation2 + $0x58] sm:$0xff] %v808
    %825 = vst [vmem:[#allocation2 + $0x60] sm:$0xff] %v809
    %826 = vst [vmem:[#allocation2 + $0x68] sm:$0xff] %v810
    %827 = vst [vmem:[#allocation2 + $0x70] sm:$0xff] %v811
    %828 = vst [vmem:[#allocation2 + $0x78] sm:$0xff] %v812
  $region21: #{gin_layer_forward.3} parent=0 // pred_fallthru
    _
  // Predicated region
  $region22: #{gin_layer_forward.3} parent=0 // pred_check
    %p829 = pneg %p18
  $region23: #{gin_layer_forward.3} parent=0 // pred_check_branch
    %831 = sbr.rel (%p829) target = $region25
  $region24: #{gin_layer_forward.3} parent=0 // pred_region
    %v832 = vld [vmem:[#allocation2] sm:$0xff]
    %v833 = vld [vmem:[#allocation2 + $0x8] sm:$0xff]
    %v834 = vld [vmem:[#allocation2 + $0x10] sm:$0xff]
    %v835 = vld [vmem:[#allocation2 + $0x18] sm:$0xff]
    %v836 = vld [vmem:[#allocation2 + $0x20] sm:$0xff]
    %v837 = vld [vmem:[#allocation2 + $0x28] sm:$0xff]
    %v838 = vld [vmem:[#allocation2 + $0x30] sm:$0xff]
    %v839 = vld [vmem:[#allocation2 + $0x38] sm:$0xff]
    %v840 = vld [vmem:[#allocation2 + $0x40] sm:$0xff]
    %v841 = vld [vmem:[#allocation2 + $0x48] sm:$0xff]
    %v842 = vld [vmem:[#allocation2 + $0x50] sm:$0xff]
    %v843 = vld [vmem:[#allocation2 + $0x58] sm:$0xff]
    %v844 = vld [vmem:[#allocation2 + $0x60] sm:$0xff]
    %v845 = vld [vmem:[#allocation2 + $0x68] sm:$0xff]
    %v846 = vld [vmem:[#allocation2 + $0x70] sm:$0xff]
    %v847 = vld [vmem:[#allocation2 + $0x78] sm:$0xff]
    %v848 = vmax.f32 %v832, 0.0
    %v849 = vmax.f32 %v833, 0.0
    %v850 = vmax.f32 %v834, 0.0
    %v851 = vmax.f32 %v835, 0.0
    %v852 = vmax.f32 %v836, 0.0
    %v853 = vmax.f32 %v837, 0.0
    %v854 = vmax.f32 %v838, 0.0
    %v855 = vmax.f32 %v839, 0.0
    %v856 = vmax.f32 %v840, 0.0
    %v857 = vmax.f32 %v841, 0.0
    %v858 = vmax.f32 %v842, 0.0
    %v859 = vmax.f32 %v843, 0.0
    %v860 = vmax.f32 %v844, 0.0
    %v861 = vmax.f32 %v845, 0.0
    %v862 = vmax.f32 %v846, 0.0
    %v863 = vmax.f32 %v847, 0.0
    %864 = vst [vmem:[%s5] sm:$0xff] %v848
    %865 = vst [vmem:[%s5 + $0x8] sm:$0xff] %v849
    %866 = vst [vmem:[%s5 + $0x10] sm:$0xff] %v850
    %867 = vst [vmem:[%s5 + $0x18] sm:$0xff] %v851
    %868 = vst [vmem:[%s5 + $0x20] sm:$0xff] %v852
    %869 = vst [vmem:[%s5 + $0x28] sm:$0xff] %v853
    %870 = vst [vmem:[%s5 + $0x30] sm:$0xff] %v854
    %871 = vst [vmem:[%s5 + $0x38] sm:$0xff] %v855
    %872 = vst [vmem:[%s5 + $0x40] sm:$0xff] %v856
    %873 = vst [vmem:[%s5 + $0x48] sm:$0xff] %v857
    %874 = vst [vmem:[%s5 + $0x50] sm:$0xff] %v858
    %875 = vst [vmem:[%s5 + $0x58] sm:$0xff] %v859
    %876 = vst [vmem:[%s5 + $0x60] sm:$0xff] %v860
    %877 = vst [vmem:[%s5 + $0x68] sm:$0xff] %v861
    %878 = vst [vmem:[%s5 + $0x70] sm:$0xff] %v862
    %879 = vst [vmem:[%s5 + $0x78] sm:$0xff] %v863
  $region25: #{gin_layer_forward.3} parent=0 // pred_fallthru
    _
  // Predicated region
  $region26: #{gin_layer_forward.3} parent=0 // pred_check
    _
  $region27: #{gin_layer_forward.3} parent=0 // pred_check_branch
    %881 = sbr.rel (0) target = $region29
  $region28: #{gin_layer_forward.3} parent=0 // pred_region
    _
  $region29: #{gin_layer_forward.3} parent=0 // pred_fallthru
    _
  // Predicated region
  $region30: #{gin_layer_forward.3} parent=0 // pred_check
    _
  $region31: #{gin_layer_forward.3} parent=0 // pred_check_branch
    %883 = sbr.rel (0) target = $region33
  $region32: #{gin_layer_forward.3} parent=0 // pred_region
    _
  $region33: #{gin_layer_forward.3} parent=0 // pred_fallthru
    _

</llo_original>
